<compile_context>
chip_gen: v6e
topology: v6e:2x2x1
jax: 0.10.0
libtpu: 0.0.40
codegen_flags: <defaults>
</compile_context>

<pallas_src>
import functools

import jax
import jax.numpy as jnp
import numpy as np
from jax.experimental import pallas as pl
from jax.experimental.pallas import tpu as pltpu

HIDDEN = 256
OUT = 256
EPS = 1e-7
MAX_TM = 1024  # largest row tile we consider (review: sweep 1024-2048)


def _round_up(n, m):
    return ((n + m - 1) // m) * m


def _row_align():
    """M-axis alignment: 256 for the 2x256^2 MXU (v6e/v7x), 128 for v5e/older."""
    try:
        kind = jax.devices()[0].device_kind.lower()
    except Exception:
        return 256
    return 128 if ("v5" in kind or "v4" in kind or "v3" in kind) else 256


def _choose_row_tile(n_base, cmax, compute_itemsize, out_itemsize, row_align):
    """Pick (tm, n_pad) so double-buffered tiles stay under a v7x-safe budget."""
    budget = 24 << 20  # well under v7x's 32 MiB scoped / 64 MiB physical VMEM

    def vmem_bytes(tm):
        x_t = tm * cmax * compute_itemsize
        o_t = tm * OUT * out_itemsize
        w = (cmax * HIDDEN + HIDDEN * OUT) * compute_itemsize + 2 * OUT * 4
        return 2 * (x_t + o_t + w)  # double-buffered inputs + output

    if n_base <= MAX_TM and vmem_bytes(n_base) <= budget:
        # Small inputs: one grid step per head.  (Grid parallelism across the
        # H heads is what the v7x megacore shards; with the default 6 heads
        # that is already >= 2x the 2 TCs/chip.)
        return n_base, n_base
    tm = MAX_TM
    while tm > row_align and vmem_bytes(tm) > budget:
        tm //= 2
    tm = max(tm, row_align)
    return tm, _round_up(n_base, tm)


def _fused_heads_kernel(x_ref, w1_ref, b1_ref, w2_ref, b2_ref, o_ref, *,
                        approx_recip):
    """One (head, row-tile) grid step: Linear -> ReLU -> Linear -> L2 normalize.

    Shapes seen by the kernel (head axis squeezed away by the BlockSpecs):
      x_ref: (tm, Cmax)   w1_ref: (Cmax, 256)  b1_ref: (1, 256)
      w2_ref: (256, 256)  b2_ref: (1, 256)     o_ref: (tm, 256)
    x/w1/w2 carry the compute dtype (bf16 on the fast path); accumulation,
    bias add, ReLU and the normalization are f32.
    """
    h = jnp.dot(x_ref[...], w1_ref[...], preferred_element_type=jnp.float32)
    h = jnp.maximum(h + b1_ref[...], 0.0)
    y = jnp.dot(h.astype(w2_ref.dtype), w2_ref[...],
                preferred_element_type=jnp.float32) + b2_ref[...]
    # feat.pow(2).sum(1, keepdim=True).pow(0.5); reciprocal is per-row (tm, 1)
    # so the (tm, 256) normalization is a broadcast multiply, not a divide.
    norm = jnp.sqrt(jnp.sum(y * y, axis=1, keepdims=True))
    inv = pl.reciprocal(norm + EPS, approx=approx_recip)
    o_ref[...] = (y * inv).astype(o_ref.dtype)


def fused_projection_heads(x, w1, b1, w2, b2, *, tm, out_dtype, approx_recip):
    """Fused multi-head projection.

    x:  (H, Np, Cmax)  stacked, zero-padded features (compute dtype)
    w1: (H, Cmax, 256), w2: (H, 256, 256) in compute dtype
    b1: (H, 1, 256),    b2: (H, 1, 256)   in f32
    Returns (H, Np, 256) in `out_dtype`.
    """
    H, Np, Cmax = x.shape
    assert Np % tm == 0, "padded row count must be divisible by the row tile"
    assert w1.shape == (H, Cmax, HIDDEN) and w2.shape == (H, HIDDEN, OUT)
    kernel = functools.partial(_fused_heads_kernel, approx_recip=approx_recip)
    return pl.pallas_call(
        kernel,
        out_shape=jax.ShapeDtypeStruct((H, Np, OUT), out_dtype),
        grid_spec=pltpu.PrefetchScalarGridSpec(
            num_scalar_prefetch=0,
            grid=(H, Np // tm),
            in_specs=[
                # Row tile of this head's features (head dim squeezed).
                pl.BlockSpec((None, tm, Cmax), lambda h, i: (h, i, 0)),
                # Per-head weights / biases: constant across the row-tile axis;
                # double-buffering prefetches head h+1's weights under head h.
                pl.BlockSpec((None, Cmax, HIDDEN), lambda h, i: (h, 0, 0)),
                pl.BlockSpec((None, 1, HIDDEN), lambda h, i: (h, 0, 0)),
                pl.BlockSpec((None, HIDDEN, OUT), lambda h, i: (h, 0, 0)),
                pl.BlockSpec((None, 1, OUT), lambda h, i: (h, 0, 0)),
            ],
            out_specs=pl.BlockSpec((None, tm, OUT), lambda h, i: (h, i, 0)),
        ),
        compiler_params=pltpu.CompilerParams(
            # Every output block is written exactly once -> both axes parallel
            # (lets the megacore shard heads x row-tiles across TensorCores).
            dimension_semantics=("parallel", "parallel"),
        ),
    )(x, w1, b1, w2, b2)


@functools.partial(
    jax.jit,
    static_argnames=("n_pad", "cmax", "tm", "out_dtype", "approx_recip"))
def _forward_stacked(feats, w1, b1, w2, b2, *, n_pad, cmax, tm, out_dtype,
                     approx_recip):
    """Pad + stack the features and run the fused kernel, all under one jit."""
    compute_dtype = w1.dtype
    # Zero row/channel padding: zero channel columns x zero W1 rows contribute
    # exactly 0 to the matmul, so real rows are unaffected.
    x_stack = jnp.stack([
        jnp.pad(f.astype(compute_dtype),
                ((0, n_pad - f.shape[0]), (0, cmax - f.shape[1])))
        for f in feats])
    return fused_projection_heads(x_stack, w1, b1, w2, b2, tm=tm,
                                  out_dtype=out_dtype,
                                  approx_recip=approx_recip)


def prepare_projection_heads(params, blocks_ids, compute_dtype=jnp.bfloat16):
    """Pad/stack the per-head weights ONCE (cache and reuse across forwards)."""
    cmax = max(int(params[fid]["w1"].shape[0]) for fid in blocks_ids)
    # TODO(synk): for widely heterogeneous channel counts, bucket heads by C
    # (or add a K-chunk grid axis with scalar-prefetched per-head K counts)
    # instead of padding every head to the global cmax.
    w1 = jnp.stack([
        jnp.pad(params[fid]["w1"],
                ((0, cmax - params[fid]["w1"].shape[0]), (0, 0)))
        for fid in blocks_ids]).astype(compute_dtype)
    b1 = jnp.stack([params[fid]["b1"] for fid in blocks_ids]).astype(jnp.float32)
    w2 = jnp.stack([params[fid]["w2"] for fid in blocks_ids]).astype(compute_dtype)
    b2 = jnp.stack([params[fid]["b2"] for fid in blocks_ids]).astype(jnp.float32)
    return {"w1": w1, "b1": b1, "w2": w2, "b2": b2, "cmax": cmax}


def projection_heads_forward(feats, prepared, *, out_dtype=jnp.bfloat16,
                             approx_recip=True):
    """Mirrors ProjectionHeads.forward; every head fused in one pallas_call."""
    n_per_head = [int(f.shape[0]) for f in feats]
    cmax = prepared["cmax"]
    row_align = _row_align()
    n_base = _round_up(max(n_per_head), row_align)
    tm, n_pad = _choose_row_tile(
        n_base, cmax,
        jnp.dtype(prepared["w1"].dtype).itemsize,
        jnp.dtype(out_dtype).itemsize,
        row_align)
    out = _forward_stacked(tuple(feats), prepared["w1"], prepared["b1"],
                           prepared["w2"], prepared["b2"],
                           n_pad=n_pad, cmax=cmax, tm=tm,
                           out_dtype=out_dtype, approx_recip=approx_recip)
    # Slice away padded rows (they hold harmless relu(b1)@w2+b2 garbage).
    return [out[h, :n, :] for h, n in enumerate(n_per_head)]


def make_projection_heads_params(blocks_ids, channels_per_block, key):
    """Deterministic synthetic parameters (stand-in for nn.Linear init)."""
    params = {}
    for feat_id, c in zip(blocks_ids, channels_per_block):
        k = jax.random.fold_in(key, feat_id)
        k1, k2, k3, k4 = jax.random.split(k, 4)
        params[feat_id] = dict(
            w1=(jax.random.normal(k1, (c, HIDDEN), jnp.float32) * 0.05),
            b1=(jax.random.normal(k2, (1, HIDDEN), jnp.float32) * 0.01),
            w2=(jax.random.normal(k3, (HIDDEN, OUT), jnp.float32) * 0.05),
            b2=(jax.random.normal(k4, (1, OUT), jnp.float32) * 0.01),
        )
    return params


def _reference_forward(feats, blocks_ids, params):
    outs = []
    for feat_id, feat in zip(blocks_ids, feats):
        p = params[feat_id]
        h = jnp.maximum(feat @ p["w1"] + p["b1"], 0.0)
        y = h @ p["w2"] + p["b2"]
        norm = jnp.sqrt(jnp.sum(y * y, axis=1, keepdims=True))
        outs.append(y / (norm + EPS))
    return outs


if __name__ == "__main__":
    key = jax.random.PRNGKey(0)

    blocks_ids = [0, 4, 7, 10, 14, 17]
    # Channel count of each tapped block's output (x.shape[1] in __init__),
    # kept small for this synthetic run.
    channels_per_block = [4, 8, 16, 16, 32, 32]
    n_rows = 128  # number of sampled feature vectors per block

    params = make_projection_heads_params(blocks_ids, channels_per_block, key)

    feats = []
    for feat_id, c in zip(blocks_ids, channels_per_block):
        kf = jax.random.fold_in(jax.random.PRNGKey(1), feat_id)
        feats.append(jax.random.normal(kf, (n_rows, c), jnp.float32))

    refs = _reference_forward(feats, blocks_ids, params)

    # Fast default path: bf16 MXU operands + f32 accumulation, bf16 output,
    # EUP approx reciprocal.  Loose tolerance vs. the f32 reference.
    prepared_bf16 = prepare_projection_heads(params, blocks_ids,
                                             compute_dtype=jnp.bfloat16)
    outs = projection_heads_forward(feats, prepared_bf16)
    outs = jax.block_until_ready(outs)
    for o, r in zip(outs, refs):
        assert o.shape == (n_rows, OUT) and o.dtype == jnp.bfloat16
        np.testing.assert_allclose(np.asarray(jnp.asarray(o, jnp.float32)),
                                   np.asarray(r), rtol=2e-2, atol=2e-2)

    # Exact path: f32 operands, f32 output, exact reciprocal -> 1e-5 check.
    prepared_f32 = prepare_projection_heads(params, blocks_ids,
                                            compute_dtype=jnp.float32)
    outs_f32 = projection_heads_forward(feats, prepared_f32,
                                        out_dtype=jnp.float32,
                                        approx_recip=False)
    outs_f32 = jax.block_until_ready(outs_f32)
    for o, r in zip(outs_f32, refs):
        assert o.shape == (n_rows, OUT)
        np.testing.assert_allclose(np.asarray(o), np.asarray(r),
                                   rtol=1e-5, atol=1e-5)

    print("KERNEL_OK")
</pallas_src>

<mosaic_0001>
module attributes {stable_mosaic.version = 11 : i64} {
  func.func @_fused_heads_kernel(%arg0: i32, %arg1: i32, %arg2: memref<1x256x32xbf16, #tpu.memory_space<vmem>>, %arg3: memref<1x32x256xbf16, #tpu.memory_space<vmem>>, %arg4: memref<1x1x256xf32, #tpu.memory_space<vmem>>, %arg5: memref<1x256x256xbf16, #tpu.memory_space<vmem>>, %arg6: memref<1x1x256xf32, #tpu.memory_space<vmem>>, %arg7: memref<1x256x256xbf16, #tpu.memory_space<vmem>>) attributes {dimension_semantics = [#tpu.dimension_semantics<parallel>, #tpu.dimension_semantics<parallel>], iteration_bounds = array<i64: 6, 1>, scalar_prefetch = 0 : i64, scratch_operands = 0 : i64, tpu.core_type = #tpu.core_type<tc>, window_params = [{transform_indices = @transform_0, window_bounds = array<i64: 1, 256, 32>}, {transform_indices = @transform_1, window_bounds = array<i64: 1, 32, 256>}, {transform_indices = @transform_2, window_bounds = array<i64: 1, 1, 256>}, {transform_indices = @transform_3, window_bounds = array<i64: 1, 256, 256>}, {transform_indices = @transform_4, window_bounds = array<i64: 1, 1, 256>}, {transform_indices = @transform_5, window_bounds = array<i64: 1, 256, 256>}]} {
    %c0 = arith.constant 0 : index
    %c0_0 = arith.constant 0 : index
    %c0_1 = arith.constant 0 : index
    %0 = vector.load %arg2[%c0, %c0_0, %c0_1] : memref<1x256x32xbf16, #tpu.memory_space<vmem>>, vector<1x256x32xbf16>
    %1 = vector.shape_cast %0 : vector<1x256x32xbf16> to vector<256x32xbf16>
    %c0_2 = arith.constant 0 : index
    %c0_3 = arith.constant 0 : index
    %c0_4 = arith.constant 0 : index
    %2 = vector.load %arg3[%c0_2, %c0_3, %c0_4] : memref<1x32x256xbf16, #tpu.memory_space<vmem>>, vector<1x32x256xbf16>
    %3 = vector.shape_cast %2 : vector<1x32x256xbf16> to vector<32x256xbf16>
    %cst = arith.constant dense<0.000000e+00> : vector<256x256xf32>
    %4 = tpu.matmul %1, %3, %cst {dimension_numbers = #tpu.dot_dimension_numbers<[1], [0], [0], [1], [0, 0, 1, 1], [], []>} : vector<256x32xbf16>, vector<32x256xbf16>, vector<256x256xf32> -> vector<256x256xf32>
    %c0_5 = arith.constant 0 : index
    %c0_6 = arith.constant 0 : index
    %c0_7 = arith.constant 0 : index
    %5 = vector.load %arg4[%c0_5, %c0_6, %c0_7] : memref<1x1x256xf32, #tpu.memory_space<vmem>>, vector<1x1x256xf32>
    %6 = vector.shape_cast %5 : vector<1x1x256xf32> to vector<1x256xf32>
    %7 = vector.broadcast %6 : vector<1x256xf32> to vector<256x256xf32>
    %8 = arith.addf %4, %7 : vector<256x256xf32>
    %cst_8 = arith.constant 0.000000e+00 : f32
    %9 = vector.broadcast %cst_8 : f32 to vector<256x256xf32>
    %10 = arith.maximumf %8, %9 : vector<256x256xf32>
    %11 = arith.truncf %10 : vector<256x256xf32> to vector<256x256xbf16>
    %c0_9 = arith.constant 0 : index
    %c0_10 = arith.constant 0 : index
    %c0_11 = arith.constant 0 : index
    %12 = vector.load %arg5[%c0_9, %c0_10, %c0_11] : memref<1x256x256xbf16, #tpu.memory_space<vmem>>, vector<1x256x256xbf16>
    %13 = vector.shape_cast %12 : vector<1x256x256xbf16> to vector<256x256xbf16>
    %cst_12 = arith.constant dense<0.000000e+00> : vector<256x256xf32>
    %14 = tpu.matmul %11, %13, %cst_12 {dimension_numbers = #tpu.dot_dimension_numbers<[1], [0], [0], [1], [0, 0, 1, 1], [], []>} : vector<256x256xbf16>, vector<256x256xbf16>, vector<256x256xf32> -> vector<256x256xf32>
    %c0_13 = arith.constant 0 : index
    %c0_14 = arith.constant 0 : index
    %c0_15 = arith.constant 0 : index
    %15 = vector.load %arg6[%c0_13, %c0_14, %c0_15] : memref<1x1x256xf32, #tpu.memory_space<vmem>>, vector<1x1x256xf32>
    %16 = vector.shape_cast %15 : vector<1x1x256xf32> to vector<1x256xf32>
    %17 = vector.broadcast %16 : vector<1x256xf32> to vector<256x256xf32>
    %18 = arith.addf %14, %17 : vector<256x256xf32>
    %19 = arith.mulf %18, %18 : vector<256x256xf32>
    %cst_16 = arith.constant dense<0.000000e+00> : vector<256xf32>
    %20 = vector.multi_reduction <add>, %19, %cst_16 [1] : vector<256x256xf32> to vector<256xf32>
    %21 = vector.shape_cast %20 : vector<256xf32> to vector<256x1xf32>
    %22 = math.sqrt %21 : vector<256x1xf32>
    %cst_17 = arith.constant 1.000000e-07 : f32
    %23 = vector.broadcast %cst_17 : f32 to vector<256x1xf32>
    %24 = arith.addf %22, %23 : vector<256x1xf32>
    %25 = tpu.reciprocal %24 {approx = true} : vector<256x1xf32> -> vector<256x1xf32>
    %26 = vector.broadcast %25 : vector<256x1xf32> to vector<256x256xf32>
    %27 = arith.mulf %18, %26 : vector<256x256xf32>
    %28 = arith.truncf %27 : vector<256x256xf32> to vector<256x256xbf16>
    %c0_18 = arith.constant 0 : index
    %c0_19 = arith.constant 0 : index
    %c0_20 = arith.constant 0 : index
    %29 = vector.load %arg7[%c0_18, %c0_19, %c0_20] : memref<1x256x256xbf16, #tpu.memory_space<vmem>>, vector<1x256x256xbf16>
    %30 = vector.shape_cast %29 : vector<1x256x256xbf16> to vector<256x256xbf16>
    %31 = vector.shape_cast %28 : vector<256x256xbf16> to vector<1x256x256xbf16>
    tpu.vector_store %arg7[%c0_18, %c0_19, %c0_20], %31 {strides = array<i32>} : memref<1x256x256xbf16, #tpu.memory_space<vmem>>, vector<1x256x256xbf16>,
    return
  }
  func.func @transform_0(%arg0: i32, %arg1: i32) -> (i32, i32, i32) {
    %c0_i32 = arith.constant 0 : i32
    %c0_i32_0 = arith.constant 0 : i32
    return %arg0, %arg1, %c0_i32 : i32, i32, i32
  }
  func.func @transform_1(%arg0: i32, %arg1: i32) -> (i32, i32, i32) {
    %c0_i32 = arith.constant 0 : i32
    %c0_i32_0 = arith.constant 0 : i32
    %c0_i32_1 = arith.constant 0 : i32
    return %arg0, %c0_i32, %c0_i32_0 : i32, i32, i32
  }
  func.func @transform_2(%arg0: i32, %arg1: i32) -> (i32, i32, i32) {
    %c0_i32 = arith.constant 0 : i32
    %c0_i32_0 = arith.constant 0 : i32
    %c0_i32_1 = arith.constant 0 : i32
    return %arg0, %c0_i32, %c0_i32_0 : i32, i32, i32
  }
  func.func @transform_3(%arg0: i32, %arg1: i32) -> (i32, i32, i32) {
    %c0_i32 = arith.constant 0 : i32
    %c0_i32_0 = arith.constant 0 : i32
    %c0_i32_1 = arith.constant 0 : i32
    return %arg0, %c0_i32, %c0_i32_0 : i32, i32, i32
  }
  func.func @transform_4(%arg0: i32, %arg1: i32) -> (i32, i32, i32) {
    %c0_i32 = arith.constant 0 : i32
    %c0_i32_0 = arith.constant 0 : i32
    %c0_i32_1 = arith.constant 0 : i32
    return %arg0, %c0_i32, %c0_i32_0 : i32, i32, i32
  }
  func.func @transform_5(%arg0: i32, %arg1: i32) -> (i32, i32, i32) {
    %c0_i32 = arith.constant 0 : i32
    %c0_i32_0 = arith.constant 0 : i32
    return %arg0, %arg1, %c0_i32 : i32, i32, i32
  }
}

</mosaic_0001>

<llo_original>
// kernel: _forward_stacked.1
$region0: #{_forward_stacked.1}
  #allocation0 [shape = 'u32[]', space=smem, size = 0x4, offset = 0x4, fixed_abs, tag = 'smem constant byte address 0x4 - core index']
  #allocation1 [shape = 'u32[144,128]{1,0:T(1,128)}', space=vmem, size = 0x12000, scoped, tag = 'internal scratch']
  %s0 = inlined_call_operand.vmem [shape: bf16[6,256,32], index: 0, kind: input, shape index: {}]
  %s1 = inlined_call_operand.vmem [shape: bf16[6,32,256], index: 1, kind: input, shape index: {}]
  %s2 = inlined_call_operand.vmem [shape: f32[6,1,256], index: 2, kind: input, shape index: {}]
  %s3 = inlined_call_operand.hbm [shape: bf16[6,256,256], index: 3, kind: input, shape index: {}]
  %s4 = inlined_call_operand.vmem [shape: f32[6,1,256], index: 4, kind: input, shape index: {}]
  %s5 = inlined_call_operand.hbm [shape: bf16[6,256,256], index: 5, kind: output, shape index: {}]
  %s6 = sld [smem:[#allocation0]]
  $region57: #{_forward_stacked.1} parent=0
    _
  %s8 = ssub.s32 1, %s6
  %s9 = scalar_select 0, %s8, %s6
  $region1: #{_forward_stacked.1} parent=0
    #allocation2 [shape = 'u8[262144]{0}', space=vmem, size = 0x40000, scoped, tag = 'input window, operand 3']
    #allocation3 [shape = 's32[2]{0}', space=sflag, size = 0x8, scoped, tag = 'scoped memory for _forward_stacked.1']
    #allocation4 [shape = 's32[2]{0}', space=sflag, size = 0x8, scoped, tag = 'scoped memory for _forward_stacked.1']
    #allocation5 [shape = 'u8[262144]{0}', space=vmem, size = 0x40000, scoped, tag = 'output window, operand 0']
    %10 = vsyncpa [#allocation3], 0
    %s11 = scalar_lea.sflag [#allocation3], 1
    %12 = vsyncpa %s11, 0
    %13 = vsyncpa [#allocation4], 0
    %s14 = scalar_lea.sflag [#allocation4], 1
    %15 = vsyncpa %s14, 0
    loop: start=0, step=1, limit=8
    $region2: #{_forward_stacked.1} parent=1 // loop_pre_header
      _
    $region3: #{_forward_stacked.1} parent=1 // loop_header
      %s17 = sphi 0, %s21
      %p18 = scmp.ge.s32.totalorder %s17, 8
      %s24 = sphi 0, %s36
      %s25 = sphi 0, %s32
      %s26 = sphi 0, %s24
      %s27 = sphi 0, %s25
      %s28 = sphi 0, %s26
      %s29 = sphi 0, %s27
      %s41 = sphi 0, %s43
      %s44 = sphi 0, %s41
      %s45 = sphi 0, %s44
      %s61 = sphi 0, %s45
      %s67 = sphi 0, %s69
      %s70 = sphi 0, %s67
      %s71 = sphi 0, %s70
      %s87 = sphi 0, %s71
      %s93 = sphi 0, %s95
      %s96 = sphi 0, %s93
      %s97 = sphi 0, %s96
      %s113 = sphi 0, %s97
      %s119 = sphi 0, %s121
      %s122 = sphi 0, %s119
      %s123 = sphi 0, %s122
      %s139 = sphi 0, %s123
      %s145 = sphi 0, %s147
      %s148 = sphi 0, %s145
      %s149 = sphi 0, %s148
      %s165 = sphi 0, %s149
      %s173 = sphi 0, %s175
      %s176 = sphi 0, %s173
      %s177 = sphi 0, %s176
      %s193 = sphi 0, %s177
    $region4: #{_forward_stacked.1} parent=1 // loop_header_branch
      %20 = sbr.rel (%p18) target = $region8
    $region5: #{_forward_stacked.1} parent=1 // loop_body
      %s22 = ssub.s32 %s17, 1
      %s23 = ssub.s32 %s17, 2
      %s30 = sadd.s32 1, %s25
      %p31 = scmp.ge.s32.totalorder %s30, 1
      %s32 = scalar_select %p31, 0, %s30
      %s33 = sadd.s32 1, %s24
      %s34 = scalar_select %p31, %s33, %s24
      %p35 = scmp.ge.s32.totalorder %s34, 6
      %s36 = scalar_select %p35, 0, %s34
      %s37 = ssub.s32 %s24, %s36
      %s38 = ssub.s32 %s25, %s32
      %s39 = sor.u32 %s37, %s38
      %p40 = scmp.eq.s32.totalorder %s39, 0
      %s42 = sadd.s32 %s41, 1
      %s43 = scalar_select %p40, %s41, %s42
      %p46 = pneg %p40
      %p47 = scmp.eq.s32.totalorder %s17, 5
      %p48 = por %p46, %p47
      %p49 = scmp.ne.s32.totalorder %s41, %s44
      %p50 = scmp.eq.s32.totalorder %s17, 0
      %p51 = por %p49, %p50
      %p52 = scmp.ne.s32.totalorder %s41, %s44
      %p53 = scmp.eq.s32.totalorder %s22, 5
      %p54 = por %p52, %p53
      %p55 = scmp.ne.s32.totalorder %s44, %s45
      %p56 = scmp.eq.s32.totalorder %s22, 0
      %p57 = por %p55, %p56
      %p58 = scmp.ne.s32.totalorder %s44, %s45
      %p59 = scmp.eq.s32.totalorder %s23, 5
      %p60 = por %p58, %p59
      %p62 = scmp.ne.s32.totalorder %s45, %s61
      %p63 = scmp.eq.s32.totalorder %s23, 0
      %p64 = por %p62, %p63
      %s65 = ssub.s32 %s24, %s36
      %p66 = scmp.eq.s32.totalorder %s65, 0
      %s68 = sadd.s32 %s67, 1
      %s69 = scalar_select %p66, %s67, %s68
      %p72 = pneg %p66
      %p73 = scmp.eq.s32.totalorder %s17, 5
      %p74 = por %p72, %p73
      %p75 = scmp.ne.s32.totalorder %s67, %s70
      %p76 = scmp.eq.s32.totalorder %s17, 0
      %p77 = por %p75, %p76
      %p78 = scmp.ne.s32.totalorder %s67, %s70
      %p79 = scmp.eq.s32.totalorder %s22, 5
      %p80 = por %p78, %p79
      %p81 = scmp.ne.s32.totalorder %s70, %s71
      %p82 = scmp.eq.s32.totalorder %s22, 0
      %p83 = por %p81, %p82
      %p84 = scmp.ne.s32.totalorder %s70, %s71
      %p85 = scmp.eq.s32.totalorder %s23, 5
      %p86 = por %p84, %p85
      %p88 = scmp.ne.s32.totalorder %s71, %s87
      %p89 = scmp.eq.s32.totalorder %s23, 0
      %p90 = por %p88, %p89
      %s91 = ssub.s32 %s24, %s36
      %p92 = scmp.eq.s32.totalorder %s91, 0
      %s94 = sadd.s32 %s93, 1
      %s95 = scalar_select %p92, %s93, %s94
      %p98 = pneg %p92
      %p99 = scmp.eq.s32.totalorder %s17, 5
      %p100 = por %p98, %p99
      %p101 = scmp.ne.s32.totalorder %s93, %s96
      %p102 = scmp.eq.s32.totalorder %s17, 0
      %p103 = por %p101, %p102
      %p104 = scmp.ne.s32.totalorder %s93, %s96
      %p105 = scmp.eq.s32.totalorder %s22, 5
      %p106 = por %p104, %p105
      %p107 = scmp.ne.s32.totalorder %s96, %s97
      %p108 = scmp.eq.s32.totalorder %s22, 0
      %p109 = por %p107, %p108
      %p110 = scmp.ne.s32.totalorder %s96, %s97
      %p111 = scmp.eq.s32.totalorder %s23, 5
      %p112 = por %p110, %p111
      %p114 = scmp.ne.s32.totalorder %s97, %s113
      %p115 = scmp.eq.s32.totalorder %s23, 0
      %p116 = por %p114, %p115
      %s117 = ssub.s32 %s24, %s36
      %p118 = scmp.eq.s32.totalorder %s117, 0
      %s120 = sadd.s32 %s119, 1
      %s121 = scalar_select %p118, %s119, %s120
      %p124 = pneg %p118
      %p125 = scmp.eq.s32.totalorder %s17, 5
      %p126 = por %p124, %p125
      %p127 = scmp.ne.s32.totalorder %s119, %s122
      %p128 = scmp.eq.s32.totalorder %s17, 0
      %p129 = por %p127, %p128
      %p130 = scmp.ne.s32.totalorder %s119, %s122
      %p131 = scmp.eq.s32.totalorder %s22, 5
      %p132 = por %p130, %p131
      %p133 = scmp.ne.s32.totalorder %s122, %s123
      %p134 = scmp.eq.s32.totalorder %s22, 0
      %p135 = por %p133, %p134
      %p136 = scmp.ne.s32.totalorder %s122, %s123
      %p137 = scmp.eq.s32.totalorder %s23, 5
      %p138 = por %p136, %p137
      %p140 = scmp.ne.s32.totalorder %s123, %s139
      %p141 = scmp.eq.s32.totalorder %s23, 0
      %p142 = por %p140, %p141
      %s143 = ssub.s32 %s24, %s36
      %p144 = scmp.eq.s32.totalorder %s143, 0
      %s146 = sadd.s32 %s145, 1
      %s147 = scalar_select %p144, %s145, %s146
      %p150 = pneg %p144
      %p151 = scmp.eq.s32.totalorder %s17, 5
      %p152 = por %p150, %p151
      %p153 = scmp.ne.s32.totalorder %s145, %s148
      %p154 = scmp.eq.s32.totalorder %s17, 0
      %p155 = por %p153, %p154
      %p156 = scmp.ne.s32.totalorder %s145, %s148
      %p157 = scmp.eq.s32.totalorder %s22, 5
      %p158 = por %p156, %p157
      %p159 = scmp.ne.s32.totalorder %s148, %s149
      %p160 = scmp.eq.s32.totalorder %s22, 0
      %p161 = por %p159, %p160
      %p162 = scmp.ne.s32.totalorder %s148, %s149
      %p163 = scmp.eq.s32.totalorder %s23, 5
      %p164 = por %p162, %p163
      %p166 = scmp.ne.s32.totalorder %s149, %s165
      %p167 = scmp.eq.s32.totalorder %s23, 0
      %p168 = por %p166, %p167
      %s169 = ssub.s32 %s24, %s36
      %s170 = ssub.s32 %s25, %s32
      %s171 = sor.u32 %s169, %s170
      %p172 = scmp.eq.s32.totalorder %s171, 0
      %s174 = sadd.s32 %s173, 1
      %s175 = scalar_select %p172, %s173, %s174
      %p178 = pneg %p172
      %p179 = scmp.eq.s32.totalorder %s17, 5
      %p180 = por %p178, %p179
      %p181 = scmp.ne.s32.totalorder %s173, %s176
      %p182 = scmp.eq.s32.totalorder %s17, 0
      %p183 = por %p181, %p182
      %p184 = scmp.ne.s32.totalorder %s173, %s176
      %p185 = scmp.eq.s32.totalorder %s22, 5
      %p186 = por %p184, %p185
      %p187 = scmp.ne.s32.totalorder %s176, %s177
      %p188 = scmp.eq.s32.totalorder %s22, 0
      %p189 = por %p187, %p188
      %p190 = scmp.ne.s32.totalorder %s176, %s177
      %p191 = scmp.eq.s32.totalorder %s23, 5
      %p192 = por %p190, %p191
      %p194 = scmp.ne.s32.totalorder %s177, %s193
      %p195 = scmp.eq.s32.totalorder %s23, 0
      %p196 = por %p194, %p195
      %p197 = scmp.le.s32.totalorder 1, %s17
      %p198 = scmp.lt.s32.totalorder %s17, 7
      %p199 = pnand %p197, %p198
      %p200 = pneg %p199
      // Predicated region
      $region9: #{_forward_stacked.1} parent=5 // pred_check
        _
      $region10: #{_forward_stacked.1} parent=5 // pred_check_branch
        %202 = sbr.rel (%p199) target = $region12
      $region11: #{_forward_stacked.1} parent=5 // pred_region
        %s203 = ssub.s32 %s17, 1
      $region12: #{_forward_stacked.1} parent=5 // pred_fallthru
        _
      %p204 = scmp.lt.s32.totalorder %s17, 6
      // Predicated region
      $region13: #{_forward_stacked.1} parent=5 // pred_check
        %p205 = pneg %p204
      $region14: #{_forward_stacked.1} parent=5 // pred_check_branch
        %207 = sbr.rel (%p205) target = $region16
      $region15: #{_forward_stacked.1} parent=5 // pred_region
        // Predicated region
        $region17: #{_forward_stacked.1} parent=15 // pred_check
          %p208 = pneg %p51
        $region18: #{_forward_stacked.1} parent=15 // pred_check_branch
          %210 = sbr.rel (%p208) target = $region20
        $region19: #{_forward_stacked.1} parent=15 // pred_region
          %s211 = smul.u32 32, %s25
          %p212 = scmp.lt.s32.totalorder %s24, 5
          %s213 = scalar_select %p212, %s24, 5
          %p214 = scmp.lt.s32.totalorder %s211, 31
          %s215 = scalar_select %p214, %s211, 31
          %s216 = smul.addr %s213, 32
          %s217 = sadd.s32 %s215, %s216
          %s218 = smul.addr %s217, 4
          %s219 = scalar_lea.vmem %s0, %s218
          %s220 = smul.u32 32, %s25
        $region20: #{_forward_stacked.1} parent=15 // pred_fallthru
          _
        // Predicated region
        $region21: #{_forward_stacked.1} parent=15 // pred_check
          %p221 = pneg %p77
        $region22: #{_forward_stacked.1} parent=15 // pred_check_branch
          %223 = sbr.rel (%p221) target = $region24
        $region23: #{_forward_stacked.1} parent=15 // pred_region
          %p224 = scmp.lt.s32.totalorder %s24, 5
          %s225 = scalar_select %p224, %s24, 5
          %s226 = smul.addr %s225, 8
          %s227 = smul.addr %s226, 4
          %s228 = scalar_lea.vmem %s1, %s227
        $region24: #{_forward_stacked.1} parent=15 // pred_fallthru
          _
        // Predicated region
        $region25: #{_forward_stacked.1} parent=15 // pred_check
          %p229 = pneg %p103
        $region26: #{_forward_stacked.1} parent=15 // pred_check_branch
          %231 = sbr.rel (%p229) target = $region28
        $region27: #{_forward_stacked.1} parent=15 // pred_region
          %p232 = scmp.lt.s32.totalorder %s24, 5
          %s233 = scalar_select %p232, %s24, 5
          %s234 = smul.addr %s233, 2
          %s235 = scalar_lea.vmem %s2, %s234
        $region28: #{_forward_stacked.1} parent=15 // pred_fallthru
          _
        // Predicated region
        $region29: #{_forward_stacked.1} parent=15 // pred_check
          %p236 = pneg %p129
        $region30: #{_forward_stacked.1} parent=15 // pred_check_branch
          %238 = sbr.rel (%p236) target = $region32
        $region31: #{_forward_stacked.1} parent=15 // pred_region
          %s239 = sand.u32 %s119, 1
          %s240 = scalar_lea.sflag [#allocation3], %s239
          %s241 = sand.u32 %s119, 1
          %s242 = smul.addr %s241, 256
          %s243 = scalar_lea.vmem [#allocation2], %s242
          %s245 = ssub.s32 4096, 4096
          %246 = vsyncadd %s240, %s245
          %s247 = smul.addr %s24, 64
          %s248 = smul.addr %s247, 64
          %s249 = scalar_lea.hbm %s3, %s248
          %s250 = sshll.u32 %s243, 4
          %s251 = int_to_ptr.vmem [resolvable:$true] %s250
          %256 = dma.hbm_to_vmem [thread:$0]  %s249, 4096, %s251, %s240, 128, 128, 8
        $region32: #{_forward_stacked.1} parent=15 // pred_fallthru
          _
        // Predicated region
        $region33: #{_forward_stacked.1} parent=15 // pred_check
          %p257 = pneg %p155
        $region34: #{_forward_stacked.1} parent=15 // pred_check_branch
          %259 = sbr.rel (%p257) target = $region36
        $region35: #{_forward_stacked.1} parent=15 // pred_region
          %p260 = scmp.lt.s32.totalorder %s24, 5
          %s261 = scalar_select %p260, %s24, 5
          %s262 = smul.addr %s261, 2
          %s263 = scalar_lea.vmem %s4, %s262
        $region36: #{_forward_stacked.1} parent=15 // pred_fallthru
          _
      $region16: #{_forward_stacked.1} parent=5 // pred_fallthru
        _
      %p264 = scmp.le.s32.totalorder 1, %s17
      %p265 = scmp.lt.s32.totalorder %s17, 7
      %p266 = pnand %p264, %p265
      %p267 = pneg %p266
      // Predicated region
      $region37: #{_forward_stacked.1} parent=5 // pred_check
        _
      $region38: #{_forward_stacked.1} parent=5 // pred_check_branch
        %269 = sbr.rel (%p266) target = $region40
      $region39: #{_forward_stacked.1} parent=5 // pred_region
        %s270 = ssub.s32 %s17, 1
        %s271 = sand.u32 %s122, 1
        %s272 = scalar_lea.sflag [#allocation3], %s271
        %s273 = sand.u32 %s122, 1
        %s274 = smul.addr %s273, 256
        %s275 = scalar_lea.vmem [#allocation2], %s274
        // Predicated region
        $region41: #{_forward_stacked.1} parent=39 // pred_check
          %p276 = pneg %p135
        $region42: #{_forward_stacked.1} parent=39 // pred_check_branch
          %278 = sbr.rel (%p276) target = $region44
        $region43: #{_forward_stacked.1} parent=39 // pred_region
          %279 = dma.done %s272, 4096
        $region44: #{_forward_stacked.1} parent=39 // pred_fallthru
          _
        %s280 = smul.u32 32, %s27
        %p281 = scmp.lt.s32.totalorder %s26, 5
        %s282 = scalar_select %p281, %s26, 5
        %p283 = scmp.lt.s32.totalorder %s280, 31
        %s284 = scalar_select %p283, %s280, 31
        %s285 = smul.addr %s282, 32
        %s286 = sadd.s32 %s284, %s285
        %s287 = smul.addr %s286, 4
        %s288 = scalar_lea.vmem %s0, %s287
        %p289 = pneg %p57
        %p290 = pneg %p54
        %p291 = scmp.lt.s32.totalorder %s26, 5
        %s292 = scalar_select %p291, %s26, 5
        %s293 = smul.addr %s292, 8
        %s294 = smul.addr %s293, 4
        %s295 = scalar_lea.vmem %s1, %s294
        %p296 = pneg %p83
        %p297 = pneg %p80
        %p298 = scmp.lt.s32.totalorder %s26, 5
        %s299 = scalar_select %p298, %s26, 5
        %s300 = smul.addr %s299, 2
        %s301 = scalar_lea.vmem %s2, %s300
        %p302 = pneg %p109
        %p303 = pneg %p106
        %s304 = sand.u32 %s122, 1
        %s305 = scalar_lea.sflag [#allocation3], %s304
        %s306 = sand.u32 %s122, 1
        %s307 = smul.addr %s306, 256
        %s308 = scalar_lea.vmem [#allocation2], %s307
        %p309 = pneg %p135
        %p310 = pneg %p132
        %p311 = scmp.lt.s32.totalorder %s26, 5
        %s312 = scalar_select %p311, %s26, 5
        %s313 = smul.addr %s312, 2
        %s314 = scalar_lea.vmem %s4, %s313
        %p315 = pneg %p161
        %p316 = pneg %p158
        %p317 = pneg %p189
        %p318 = pneg %p186
        %s319 = sand.u32 %s176, 1
        %s320 = scalar_lea.sflag [#allocation4], %s319
        %s321 = sand.u32 %s176, 1
        %s322 = smul.addr %s321, 256
        %s323 = scalar_lea.vmem [#allocation5], %s322
        %s324 = smul.u32 32, %s27
        %p325 = scmp.lt.s32.totalorder %s26, 5
        %s326 = scalar_select %p325, %s26, 5
        %p327 = scmp.lt.s32.totalorder %s324, 31
        %s328 = scalar_select %p327, %s324, 31
        %s329 = smul.addr %s326, 32
        %s330 = sadd.s32 %s328, %s329
        %s331 = smul.addr %s330, 4
        %s332 = scalar_lea.vmem %s0, %s331
        %s333 = smul.u32 32, %s27
        %p334 = scmp.lt.s32.totalorder %s26, 5
        %s335 = scalar_select %p334, %s26, 5
        %s336 = smul.addr %s335, 8
        %s337 = smul.addr %s336, 4
        %s338 = scalar_lea.vmem %s1, %s337
        %p339 = scmp.lt.s32.totalorder %s26, 5
        %s340 = scalar_select %p339, %s26, 5
        %s341 = smul.addr %s340, 2
        %s342 = scalar_lea.vmem %s2, %s341
        %p343 = scmp.lt.s32.totalorder %s26, 5
        %s344 = scalar_select %p343, %s26, 5
        %s345 = smul.addr %s344, 2
        %s346 = scalar_lea.vmem %s4, %s345
        %s347 = smul.u32 32, %s27
        %v349 = vld [vmem:[%s332] sm:$0xf]
        %v350 = vld [vmem:[%s332 + $0x4] sm:$0xf]
        %v351 = vld [vmem:[%s332 + $0x8] sm:$0xf]
        %v352 = vld [vmem:[%s332 + $0xc] sm:$0xf]
        %v353 = vld [vmem:[%s332 + $0x10] sm:$0xf]
        %v354 = vld [vmem:[%s332 + $0x14] sm:$0xf]
        %v355 = vld [vmem:[%s332 + $0x18] sm:$0xf]
        %v356 = vld [vmem:[%s332 + $0x1c] sm:$0xf]
        %v357 = vld [vmem:[%s332 + $0x20] sm:$0xf]
        %v358 = vld [vmem:[%s332 + $0x24] sm:$0xf]
        %v359 = vld [vmem:[%s332 + $0x28] sm:$0xf]
        %v360 = vld [vmem:[%s332 + $0x2c] sm:$0xf]
        %v361 = vld [vmem:[%s332 + $0x30] sm:$0xf]
        %v362 = vld [vmem:[%s332 + $0x34] sm:$0xf]
        %v363 = vld [vmem:[%s332 + $0x38] sm:$0xf]
        %v364 = vld [vmem:[%s332 + $0x3c] sm:$0xf]
        %v365 = vld [vmem:[%s332 + $0x40] sm:$0xf]
        %v366 = vld [vmem:[%s332 + $0x44] sm:$0xf]
        %v367 = vld [vmem:[%s332 + $0x48] sm:$0xf]
        %v368 = vld [vmem:[%s332 + $0x4c] sm:$0xf]
        %v369 = vld [vmem:[%s332 + $0x50] sm:$0xf]
        %v370 = vld [vmem:[%s332 + $0x54] sm:$0xf]
        %v371 = vld [vmem:[%s332 + $0x58] sm:$0xf]
        %v372 = vld [vmem:[%s332 + $0x5c] sm:$0xf]
        %v373 = vld [vmem:[%s332 + $0x60] sm:$0xf]
        %v374 = vld [vmem:[%s332 + $0x64] sm:$0xf]
        %v375 = vld [vmem:[%s332 + $0x68] sm:$0xf]
        %v376 = vld [vmem:[%s332 + $0x6c] sm:$0xf]
        %v377 = vld [vmem:[%s332 + $0x70] sm:$0xf]
        %v378 = vld [vmem:[%s332 + $0x74] sm:$0xf]
        %v379 = vld [vmem:[%s332 + $0x78] sm:$0xf]
        %v380 = vld [vmem:[%s332 + $0x7c] sm:$0xf]
        %v381 = vld [vmem:[%s338] sm:$0xff]
        %v382 = vld [vmem:[%s338 + $0x8] sm:$0xff]
        %v383 = vld [vmem:[%s338 + $0x10] sm:$0xff]
        %v384 = vld [vmem:[%s338 + $0x18] sm:$0xff]
        %v385 = vld [vmem:[%s342] sm:$0x3]
        %v387 = vlaneseq
        %v388 = vshrl.u32 %v387, 7
        %v389 = vsub.s32 0, %v388
        %v390 = vrot.slane %v385, %v389
        %v391 = vlaneseq
        %v392 = vshrl.u32 %v391, 7
        %v393 = vsub.s32 1, %v392
        %v394 = vrot.slane %v385, %v393
        %v429 = vunpack.c.l.b16 %v349
        %v430 = vunpack.c.l.b16 %v350
        %v431 = vunpack.c.l.b16 %v351
        %v432 = vunpack.c.l.b16 %v352
        %v433 = vunpack.c.l.b16 %v353
        %v434 = vunpack.c.l.b16 %v354
        %v435 = vunpack.c.l.b16 %v355
        %v436 = vunpack.c.l.b16 %v356
        %v437 = vunpack.c.l.b16 %v357
        %v438 = vunpack.c.l.b16 %v358
        %v439 = vunpack.c.l.b16 %v359
        %v440 = vunpack.c.l.b16 %v360
        %v441 = vunpack.c.l.b16 %v361
        %v442 = vunpack.c.l.b16 %v362
        %v443 = vunpack.c.l.b16 %v363
        %v444 = vunpack.c.l.b16 %v364
        %v445 = vunpack.c.l.b16 %v365
        %v446 = vunpack.c.l.b16 %v366
        %v447 = vunpack.c.l.b16 %v367
        %v448 = vunpack.c.l.b16 %v368
        %v449 = vunpack.c.l.b16 %v369
        %v450 = vunpack.c.l.b16 %v370
        %v451 = vunpack.c.l.b16 %v371
        %v452 = vunpack.c.l.b16 %v372
        %v453 = vunpack.c.l.b16 %v373
        %v454 = vunpack.c.l.b16 %v374
        %v455 = vunpack.c.l.b16 %v375
        %v456 = vunpack.c.l.b16 %v376
        %v457 = vunpack.c.l.b16 %v377
        %v458 = vunpack.c.l.b16 %v378
        %v459 = vunpack.c.l.b16 %v379
        %v460 = vunpack.c.l.b16 %v380
        %v461 = vpack.c.b16 %v430, %v429
        %v462 = vpack.c.b16 %v432, %v431
        %v463 = vpack.c.b16 %v434, %v433
        %v464 = vpack.c.b16 %v436, %v435
        %v465 = vpack.c.b16 %v438, %v437
        %v466 = vpack.c.b16 %v440, %v439
        %v467 = vpack.c.b16 %v442, %v441
        %v468 = vpack.c.b16 %v444, %v443
        %v469 = vpack.c.b16 %v446, %v445
        %v470 = vpack.c.b16 %v448, %v447
        %v471 = vpack.c.b16 %v450, %v449
        %v472 = vpack.c.b16 %v452, %v451
        %v473 = vpack.c.b16 %v454, %v453
        %v474 = vpack.c.b16 %v456, %v455
        %v475 = vpack.c.b16 %v458, %v457
        %v476 = vpack.c.b16 %v460, %v459
        %v481 = vunpack.c.l.b16 %v381
        %v482 = vunpack.c.h.b16 %v381
        %v483 = vunpack.c.l.b16 %v382
        %v484 = vunpack.c.h.b16 %v382
        %v485 = vunpack.c.l.b16 %v383
        %v486 = vunpack.c.h.b16 %v383
        %v487 = vunpack.c.l.b16 %v384
        %v488 = vunpack.c.h.b16 %v384
        %v489 = vpack.c.b16 %v483, %v481
        %v490 = vpack.c.b16 %v484, %v482
        %v491 = vpack.c.b16 %v487, %v485
        %v492 = vpack.c.b16 %v488, %v486
        %vm497 = vcmask 261120
        %v499 = vsel %vm497, %v461, 0
        %v502 = vsel %vm497, %v462, 0
        %v505 = vsel %vm497, %v463, 0
        %v508 = vsel %vm497, %v464, 0
        %v511 = vsel %vm497, %v465, 0
        %v514 = vsel %vm497, %v466, 0
        %v517 = vsel %vm497, %v467, 0
        %v520 = vsel %vm497, %v468, 0
        %v523 = vsel %vm497, %v469, 0
        %v526 = vsel %vm497, %v470, 0
        %v529 = vsel %vm497, %v471, 0
        %v532 = vsel %vm497, %v472, 0
        %v535 = vsel %vm497, %v473, 0
        %v538 = vsel %vm497, %v474, 0
        %v541 = vsel %vm497, %v475, 0
        %v544 = vsel %vm497, %v476, 0
        %546 = vmatprep.subr.bf16.mxu0 0
        %547 = vmatpush1.bf16.msra.mxu0 0
        %548 = vmatprep.subr.bf16.mxu0 0
        %549 = vmatpush1.bf16.msra.mxu0 0
        %550 = vmatprep.subr.bf16.mxu0 0
        %551 = vmatpush1.bf16.msra.mxu0 0
        %552 = vmatprep.subr.bf16.mxu0 0
        %553 = vmatpush1.bf16.msra.mxu0 0
        %554 = vmatprep.subr.bf16.mxu0 0
        %555 = vmatpush1.bf16.msra.mxu0 0
        %556 = vmatprep.subr.bf16.mxu0 0
        %557 = vmatpush1.bf16.msra.mxu0 0
        %558 = vmatprep.subr.bf16.mxu0 %v492
        %559 = vmatpush1.bf16.msra.mxu0 %v491
        %560 = vmatprep.subr.bf16.mxu0 %v490
        %561 = vmatpush1.bf16.msra.mxu0 %v489
        %562 = vmatprep.subr.bf16.mxu0 0
        %563 = vmatpush2.bf16.msra.mxu0 0
        %564 = vmatprep.subr.bf16.mxu0 0
        %565 = vmatpush2.bf16.msra.mxu0 0
        %566 = vmatprep.subr.bf16.mxu0 0
        %567 = vmatpush2.bf16.msra.mxu0 0
        %568 = vmatprep.subr.bf16.mxu0 0
        %569 = vmatpush2.bf16.msra.mxu0 0
        %570 = vmatprep.subr.bf16.mxu0 0
        %571 = vmatpush2.bf16.msra.mxu0 0
        %572 = vmatprep.subr.bf16.mxu0 0
        %573 = vmatpush2.bf16.msra.mxu0 0
        %574 = vmatprep.subr.bf16.mxu0 0
        %575 = vmatpush2.bf16.msra.mxu0 0
        %576 = vmatprep.subr.bf16.mxu0 0
        %577 = vmatpush2.bf16.msra.mxu0 0
        %578 = vmatprep.mubr.bf16.mxu0 0
        %579 = vmatmul.mubr.bf16.gmra.mxu0 %v499
        %v580 = vpop.f32.mrf.mxu0
        %v581 = vadd.f32 %v390, %v580
        %v582 = vpop.f32.mrf.mxu0
        %v583 = vadd.f32 %v394, %v582
        %v584 = vpop.f32.mrf.mxu0
        %v585 = vadd.f32 %v390, %v584
        %v586 = vpop.f32.mrf.mxu0
        %v587 = vadd.f32 %v394, %v586
        %588 = vmatprep.mubr.bf16.mxu0 0
        %589 = vmatmul.mubr.bf16.gmra.mxu0 %v502
        %v590 = vpop.f32.mrf.mxu0
        %v591 = vadd.f32 %v390, %v590
        %v592 = vpop.f32.mrf.mxu0
        %v593 = vadd.f32 %v394, %v592
        %v594 = vpop.f32.mrf.mxu0
        %v595 = vadd.f32 %v390, %v594
        %v596 = vpop.f32.mrf.mxu0
        %v597 = vadd.f32 %v394, %v596
        %598 = vmatprep.mubr.bf16.mxu0 0
        %599 = vmatmul.mubr.bf16.gmra.mxu0 %v505
        %v600 = vpop.f32.mrf.mxu0
        %v601 = vadd.f32 %v390, %v600
        %v602 = vpop.f32.mrf.mxu0
        %v603 = vadd.f32 %v394, %v602
        %v604 = vpop.f32.mrf.mxu0
        %v605 = vadd.f32 %v390, %v604
        %v606 = vpop.f32.mrf.mxu0
        %v607 = vadd.f32 %v394, %v606
        %608 = vmatprep.mubr.bf16.mxu0 0
        %609 = vmatmul.mubr.bf16.gmra.mxu0 %v508
        %v610 = vpop.f32.mrf.mxu0
        %v611 = vadd.f32 %v390, %v610
        %v612 = vpop.f32.mrf.mxu0
        %v613 = vadd.f32 %v394, %v612
        %v614 = vpop.f32.mrf.mxu0
        %v615 = vadd.f32 %v390, %v614
        %v616 = vpop.f32.mrf.mxu0
        %v617 = vadd.f32 %v394, %v616
        %618 = vmatprep.mubr.bf16.mxu0 0
        %619 = vmatmul.mubr.bf16.gmra.mxu0 %v511
        %v620 = vpop.f32.mrf.mxu0
        %v621 = vadd.f32 %v390, %v620
        %v622 = vpop.f32.mrf.mxu0
        %v623 = vadd.f32 %v394, %v622
        %v624 = vpop.f32.mrf.mxu0
        %v625 = vadd.f32 %v390, %v624
        %v626 = vpop.f32.mrf.mxu0
        %v627 = vadd.f32 %v394, %v626
        %628 = vmatprep.mubr.bf16.mxu0 0
        %629 = vmatmul.mubr.bf16.gmra.mxu0 %v514
        %v630 = vpop.f32.mrf.mxu0
        %v631 = vadd.f32 %v390, %v630
        %v632 = vpop.f32.mrf.mxu0
        %v633 = vadd.f32 %v394, %v632
        %v634 = vpop.f32.mrf.mxu0
        %v635 = vadd.f32 %v390, %v634
        %v636 = vpop.f32.mrf.mxu0
        %v637 = vadd.f32 %v394, %v636
        %638 = vmatprep.mubr.bf16.mxu0 0
        %639 = vmatmul.mubr.bf16.gmra.mxu0 %v517
        %v640 = vpop.f32.mrf.mxu0
        %v641 = vadd.f32 %v390, %v640
        %v642 = vpop.f32.mrf.mxu0
        %v643 = vadd.f32 %v394, %v642
        %v644 = vpop.f32.mrf.mxu0
        %v645 = vadd.f32 %v390, %v644
        %v646 = vpop.f32.mrf.mxu0
        %v647 = vadd.f32 %v394, %v646
        %648 = vmatprep.mubr.bf16.mxu0 0
        %649 = vmatmul.mubr.bf16.gmra.mxu0 %v520
        %v650 = vpop.f32.mrf.mxu0
        %v651 = vadd.f32 %v390, %v650
        %v652 = vpop.f32.mrf.mxu0
        %v653 = vadd.f32 %v394, %v652
        %v654 = vpop.f32.mrf.mxu0
        %v655 = vadd.f32 %v390, %v654
        %v656 = vpop.f32.mrf.mxu0
        %v657 = vadd.f32 %v394, %v656
        %658 = vmatprep.mubr.bf16.mxu0 0
        %659 = vmatmul.mubr.bf16.gmra.mxu0 %v523
        %v660 = vpop.f32.mrf.mxu0
        %v661 = vadd.f32 %v390, %v660
        %v662 = vpop.f32.mrf.mxu0
        %v663 = vadd.f32 %v394, %v662
        %v664 = vpop.f32.mrf.mxu0
        %v665 = vadd.f32 %v390, %v664
        %v666 = vpop.f32.mrf.mxu0
        %v667 = vadd.f32 %v394, %v666
        %668 = vmatprep.mubr.bf16.mxu0 0
        %669 = vmatmul.mubr.bf16.gmra.mxu0 %v526
        %v670 = vpop.f32.mrf.mxu0
        %v671 = vadd.f32 %v390, %v670
        %v672 = vpop.f32.mrf.mxu0
        %v673 = vadd.f32 %v394, %v672
        %v674 = vpop.f32.mrf.mxu0
        %v675 = vadd.f32 %v390, %v674
        %v676 = vpop.f32.mrf.mxu0
        %v677 = vadd.f32 %v394, %v676
        %678 = vmatprep.mubr.bf16.mxu0 0
        %679 = vmatmul.mubr.bf16.gmra.mxu0 %v529
        %v680 = vpop.f32.mrf.mxu0
        %v681 = vadd.f32 %v390, %v680
        %v682 = vpop.f32.mrf.mxu0
        %v683 = vadd.f32 %v394, %v682
        %v684 = vpop.f32.mrf.mxu0
        %v685 = vadd.f32 %v390, %v684
        %v686 = vpop.f32.mrf.mxu0
        %v687 = vadd.f32 %v394, %v686
        %688 = vmatprep.mubr.bf16.mxu0 0
        %689 = vmatmul.mubr.bf16.gmra.mxu0 %v532
        %v690 = vpop.f32.mrf.mxu0
        %v691 = vadd.f32 %v390, %v690
        %v692 = vpop.f32.mrf.mxu0
        %v693 = vadd.f32 %v394, %v692
        %v694 = vpop.f32.mrf.mxu0
        %v695 = vadd.f32 %v390, %v694
        %v696 = vpop.f32.mrf.mxu0
        %v697 = vadd.f32 %v394, %v696
        %698 = vmatprep.mubr.bf16.mxu0 0
        %699 = vmatmul.mubr.bf16.gmra.mxu0 %v535
        %v700 = vpop.f32.mrf.mxu0
        %v701 = vadd.f32 %v390, %v700
        %v702 = vpop.f32.mrf.mxu0
        %v703 = vadd.f32 %v394, %v702
        %v704 = vpop.f32.mrf.mxu0
        %v705 = vadd.f32 %v390, %v704
        %v706 = vpop.f32.mrf.mxu0
        %v707 = vadd.f32 %v394, %v706
        %708 = vmatprep.mubr.bf16.mxu0 0
        %709 = vmatmul.mubr.bf16.gmra.mxu0 %v538
        %v710 = vpop.f32.mrf.mxu0
        %v711 = vadd.f32 %v390, %v710
        %v712 = vpop.f32.mrf.mxu0
        %v713 = vadd.f32 %v394, %v712
        %v714 = vpop.f32.mrf.mxu0
        %v715 = vadd.f32 %v390, %v714
        %v716 = vpop.f32.mrf.mxu0
        %v717 = vadd.f32 %v394, %v716
        %718 = vmatprep.mubr.bf16.mxu0 0
        %719 = vmatmul.mubr.bf16.gmra.mxu0 %v541
        %v720 = vpop.f32.mrf.mxu0
        %v721 = vadd.f32 %v390, %v720
        %v722 = vpop.f32.mrf.mxu0
        %v723 = vadd.f32 %v394, %v722
        %v724 = vpop.f32.mrf.mxu0
        %v725 = vadd.f32 %v390, %v724
        %v726 = vpop.f32.mrf.mxu0
        %v727 = vadd.f32 %v394, %v726
        %728 = vmatprep.mubr.bf16.mxu0 0
        %729 = vmatmul.mubr.bf16.gmra.mxu0 %v544
        %v730 = vpop.f32.mrf.mxu0
        %v731 = vadd.f32 %v390, %v730
        %v732 = vpop.f32.mrf.mxu0
        %v733 = vadd.f32 %v394, %v732
        %v734 = vpop.f32.mrf.mxu0
        %v735 = vadd.f32 %v390, %v734
        %v736 = vpop.f32.mrf.mxu0
        %v737 = vadd.f32 %v394, %v736
        %738 = vdwg.mxu0
        %v739 = vmax.f32 %v581, 0.0
        %v740 = vmax.f32 %v583, 0.0
        %v741 = vmax.f32 %v585, 0.0
        %v742 = vmax.f32 %v587, 0.0
        %v743 = vmax.f32 %v591, 0.0
        %v744 = vmax.f32 %v593, 0.0
        %v745 = vmax.f32 %v595, 0.0
        %v746 = vmax.f32 %v597, 0.0
        %v747 = vmax.f32 %v601, 0.0
        %v748 = vmax.f32 %v603, 0.0
        %v749 = vmax.f32 %v605, 0.0
        %v750 = vmax.f32 %v607, 0.0
        %v751 = vmax.f32 %v611, 0.0
        %v752 = vmax.f32 %v613, 0.0
        %v753 = vmax.f32 %v615, 0.0
        %v754 = vmax.f32 %v617, 0.0
        %v755 = vmax.f32 %v621, 0.0
        %v756 = vmax.f32 %v623, 0.0
        %v757 = vmax.f32 %v625, 0.0
        %v758 = vmax.f32 %v627, 0.0
        %v759 = vmax.f32 %v631, 0.0
        %v760 = vmax.f32 %v633, 0.0
        %v761 = vmax.f32 %v635, 0.0
        %v762 = vmax.f32 %v637, 0.0
        %v763 = vmax.f32 %v641, 0.0
        %v764 = vmax.f32 %v643, 0.0
        %v765 = vmax.f32 %v645, 0.0
        %v766 = vmax.f32 %v647, 0.0
        %v767 = vmax.f32 %v651, 0.0
        %v768 = vmax.f32 %v653, 0.0
        %v769 = vmax.f32 %v655, 0.0
        %v770 = vmax.f32 %v657, 0.0
        %v771 = vmax.f32 %v661, 0.0
        %v772 = vmax.f32 %v663, 0.0
        %v773 = vmax.f32 %v665, 0.0
        %v774 = vmax.f32 %v667, 0.0
        %v775 = vmax.f32 %v671, 0.0
        %v776 = vmax.f32 %v673, 0.0
        %v777 = vmax.f32 %v675, 0.0
        %v778 = vmax.f32 %v677, 0.0
        %v779 = vmax.f32 %v681, 0.0
        %v780 = vmax.f32 %v683, 0.0
        %v781 = vmax.f32 %v685, 0.0
        %v782 = vmax.f32 %v687, 0.0
        %v783 = vmax.f32 %v691, 0.0
        %v784 = vmax.f32 %v693, 0.0
        %v785 = vmax.f32 %v695, 0.0
        %v786 = vmax.f32 %v697, 0.0
        %v787 = vmax.f32 %v701, 0.0
        %v788 = vmax.f32 %v703, 0.0
        %v789 = vmax.f32 %v705, 0.0
        %v790 = vmax.f32 %v707, 0.0
        %v791 = vmax.f32 %v711, 0.0
        %v792 = vmax.f32 %v713, 0.0
        %v793 = vmax.f32 %v715, 0.0
        %v794 = vmax.f32 %v717, 0.0
        %v795 = vmax.f32 %v721, 0.0
        %v796 = vmax.f32 %v723, 0.0
        %v797 = vmax.f32 %v725, 0.0
        %v798 = vmax.f32 %v727, 0.0
        %v799 = vmax.f32 %v731, 0.0
        %v800 = vmax.f32 %v733, 0.0
        %v801 = vmax.f32 %v735, 0.0
        %v802 = vmax.f32 %v737, 0.0
        %v803 = vpack.c.bf16 %v741, %v739
        %v804 = vpack.c.bf16 %v742, %v740
        %v805 = vpack.c.bf16 %v745, %v743
        %v806 = vpack.c.bf16 %v746, %v744
        %v807 = vpack.c.bf16 %v749, %v747
        %v808 = vpack.c.bf16 %v750, %v748
        %v809 = vpack.c.bf16 %v753, %v751
        %v810 = vpack.c.bf16 %v754, %v752
        %v811 = vpack.c.bf16 %v757, %v755
        %v812 = vpack.c.bf16 %v758, %v756
        %v813 = vpack.c.bf16 %v761, %v759
        %v814 = vpack.c.bf16 %v762, %v760
        %v815 = vpack.c.bf16 %v765, %v763
        %v816 = vpack.c.bf16 %v766, %v764
        %v817 = vpack.c.bf16 %v769, %v767
        %v818 = vpack.c.bf16 %v770, %v768
        %v819 = vpack.c.bf16 %v773, %v771
        %v820 = vpack.c.bf16 %v774, %v772
        %v821 = vpack.c.bf16 %v777, %v775
        %v822 = vpack.c.bf16 %v778, %v776
        %v823 = vpack.c.bf16 %v781, %v779
        %v824 = vpack.c.bf16 %v782, %v780
        %v825 = vpack.c.bf16 %v785, %v783
        %v826 = vpack.c.bf16 %v786, %v784
        %v827 = vpack.c.bf16 %v789, %v787
        %v828 = vpack.c.bf16 %v790, %v788
        %v829 = vpack.c.bf16 %v793, %v791
        %v830 = vpack.c.bf16 %v794, %v792
        %v831 = vpack.c.bf16 %v797, %v795
        %v832 = vpack.c.bf16 %v798, %v796
        %v833 = vpack.c.bf16 %v801, %v799
        %v834 = vpack.c.bf16 %v802, %v800
        %v835 = vld [vmem:[%s275] sm:$0xff]
        %v836 = vld [vmem:[%s275 + $0x8] sm:$0xff]
        %v837 = vld [vmem:[%s275 + $0x10] sm:$0xff]
        %v838 = vld [vmem:[%s275 + $0x18] sm:$0xff]
        %v839 = vld [vmem:[%s275 + $0x20] sm:$0xff]
        %v840 = vld [vmem:[%s275 + $0x28] sm:$0xff]
        %v841 = vld [vmem:[%s275 + $0x30] sm:$0xff]
        %v842 = vld [vmem:[%s275 + $0x38] sm:$0xff]
        %v843 = vld [vmem:[%s275 + $0x40] sm:$0xff]
        %v844 = vld [vmem:[%s275 + $0x48] sm:$0xff]
        %v845 = vld [vmem:[%s275 + $0x50] sm:$0xff]
        %v846 = vld [vmem:[%s275 + $0x58] sm:$0xff]
        %v847 = vld [vmem:[%s275 + $0x60] sm:$0xff]
        %v848 = vld [vmem:[%s275 + $0x68] sm:$0xff]
        %v849 = vld [vmem:[%s275 + $0x70] sm:$0xff]
        %v850 = vld [vmem:[%s275 + $0x78] sm:$0xff]
        %v851 = vld [vmem:[%s275 + $0x80] sm:$0xff]
        %v852 = vld [vmem:[%s275 + $0x88] sm:$0xff]
        %v853 = vld [vmem:[%s275 + $0x90] sm:$0xff]
        %v854 = vld [vmem:[%s275 + $0x98] sm:$0xff]
        %v855 = vld [vmem:[%s275 + $0xa0] sm:$0xff]
        %v856 = vld [vmem:[%s275 + $0xa8] sm:$0xff]
        %v857 = vld [vmem:[%s275 + $0xb0] sm:$0xff]
        %v858 = vld [vmem:[%s275 + $0xb8] sm:$0xff]
        %v859 = vld [vmem:[%s275 + $0xc0] sm:$0xff]
        %v860 = vld [vmem:[%s275 + $0xc8] sm:$0xff]
        %v861 = vld [vmem:[%s275 + $0xd0] sm:$0xff]
        %v862 = vld [vmem:[%s275 + $0xd8] sm:$0xff]
        %v863 = vld [vmem:[%s275 + $0xe0] sm:$0xff]
        %v864 = vld [vmem:[%s275 + $0xe8] sm:$0xff]
        %v865 = vld [vmem:[%s275 + $0xf0] sm:$0xff]
        %v866 = vld [vmem:[%s275 + $0xf8] sm:$0xff]
        %v867 = vld [vmem:[%s346] sm:$0x3]
        %v869 = vlaneseq
        %v870 = vshrl.u32 %v869, 7
        %v871 = vsub.s32 0, %v870
        %v872 = vrot.slane %v867, %v871
        %v873 = vlaneseq
        %v874 = vshrl.u32 %v873, 7
        %v875 = vsub.s32 1, %v874
        %v876 = vrot.slane %v867, %v875
        %v911 = vunpack.c.l.b16 %v835
        %v912 = vunpack.c.h.b16 %v835
        %v913 = vunpack.c.l.b16 %v836
        %v914 = vunpack.c.h.b16 %v836
        %v915 = vunpack.c.l.b16 %v837
        %v916 = vunpack.c.h.b16 %v837
        %v917 = vunpack.c.l.b16 %v838
        %v918 = vunpack.c.h.b16 %v838
        %v919 = vunpack.c.l.b16 %v839
        %v920 = vunpack.c.h.b16 %v839
        %v921 = vunpack.c.l.b16 %v840
        %v922 = vunpack.c.h.b16 %v840
        %v923 = vunpack.c.l.b16 %v841
        %v924 = vunpack.c.h.b16 %v841
        %v925 = vunpack.c.l.b16 %v842
        %v926 = vunpack.c.h.b16 %v842
        %v927 = vunpack.c.l.b16 %v843
        %v928 = vunpack.c.h.b16 %v843
        %v929 = vunpack.c.l.b16 %v844
        %v930 = vunpack.c.h.b16 %v844
        %v931 = vunpack.c.l.b16 %v845
        %v932 = vunpack.c.h.b16 %v845
        %v933 = vunpack.c.l.b16 %v846
        %v934 = vunpack.c.h.b16 %v846
        %v935 = vunpack.c.l.b16 %v847
        %v936 = vunpack.c.h.b16 %v847
        %v937 = vunpack.c.l.b16 %v848
        %v938 = vunpack.c.h.b16 %v848
        %v939 = vunpack.c.l.b16 %v849
        %v940 = vunpack.c.h.b16 %v849
        %v941 = vunpack.c.l.b16 %v850
        %v942 = vunpack.c.h.b16 %v850
        %v943 = vunpack.c.l.b16 %v851
        %v944 = vunpack.c.h.b16 %v851
        %v945 = vunpack.c.l.b16 %v852
        %v946 = vunpack.c.h.b16 %v852
        %v947 = vunpack.c.l.b16 %v853
        %v948 = vunpack.c.h.b16 %v853
        %v949 = vunpack.c.l.b16 %v854
        %v950 = vunpack.c.h.b16 %v854
        %v951 = vunpack.c.l.b16 %v855
        %v952 = vunpack.c.h.b16 %v855
        %v953 = vunpack.c.l.b16 %v856
        %v954 = vunpack.c.h.b16 %v856
        %v955 = vunpack.c.l.b16 %v857
        %v956 = vunpack.c.h.b16 %v857
        %v957 = vunpack.c.l.b16 %v858
        %v958 = vunpack.c.h.b16 %v858
        %v959 = vunpack.c.l.b16 %v859
        %v960 = vunpack.c.h.b16 %v859
        %v961 = vunpack.c.l.b16 %v860
        %v962 = vunpack.c.h.b16 %v860
        %v963 = vunpack.c.l.b16 %v861
        %v964 = vunpack.c.h.b16 %v861
        %v965 = vunpack.c.l.b16 %v862
        %v966 = vunpack.c.h.b16 %v862
        %v967 = vunpack.c.l.b16 %v863
        %v968 = vunpack.c.h.b16 %v863
        %v969 = vunpack.c.l.b16 %v864
        %v970 = vunpack.c.h.b16 %v864
        %v971 = vunpack.c.l.b16 %v865
        %v972 = vunpack.c.h.b16 %v865
        %v973 = vunpack.c.l.b16 %v866
        %v974 = vunpack.c.h.b16 %v866
        %v975 = vpack.c.b16 %v913, %v911
        %v976 = vpack.c.b16 %v914, %v912
        %v977 = vpack.c.b16 %v917, %v915
        %v978 = vpack.c.b16 %v918, %v916
        %v979 = vpack.c.b16 %v921, %v919
        %v980 = vpack.c.b16 %v922, %v920
        %v981 = vpack.c.b16 %v925, %v923
        %v982 = vpack.c.b16 %v926, %v924
        %v983 = vpack.c.b16 %v929, %v927
        %v984 = vpack.c.b16 %v930, %v928
        %v985 = vpack.c.b16 %v933, %v931
        %v986 = vpack.c.b16 %v934, %v932
        %v987 = vpack.c.b16 %v937, %v935
        %v988 = vpack.c.b16 %v938, %v936
        %v989 = vpack.c.b16 %v941, %v939
        %v990 = vpack.c.b16 %v942, %v940
        %v991 = vpack.c.b16 %v945, %v943
        %v992 = vpack.c.b16 %v946, %v944
        %v993 = vpack.c.b16 %v949, %v947
        %v994 = vpack.c.b16 %v950, %v948
        %v995 = vpack.c.b16 %v953, %v951
        %v996 = vpack.c.b16 %v954, %v952
        %v997 = vpack.c.b16 %v957, %v955
        %v998 = vpack.c.b16 %v958, %v956
        %v999 = vpack.c.b16 %v961, %v959
        %v1000 = vpack.c.b16 %v962, %v960
        %v1001 = vpack.c.b16 %v965, %v963
        %v1002 = vpack.c.b16 %v966, %v964
        %v1003 = vpack.c.b16 %v969, %v967
        %v1004 = vpack.c.b16 %v970, %v968
        %v1005 = vpack.c.b16 %v973, %v971
        %v1006 = vpack.c.b16 %v974, %v972
        %1039 = vmatprep.subr.bf16.mxu0 %v990
        %1040 = vmatpush1.bf16.msra.mxu0 %v989
        %1041 = vmatprep.subr.bf16.mxu0 %v988
        %1042 = vmatpush1.bf16.msra.mxu0 %v987
        %1043 = vmatprep.subr.bf16.mxu0 %v986
        %1044 = vmatpush1.bf16.msra.mxu0 %v985
        %1045 = vmatprep.subr.bf16.mxu0 %v984
        %1046 = vmatpush1.bf16.msra.mxu0 %v983
        %1047 = vmatprep.subr.bf16.mxu0 %v982
        %1048 = vmatpush1.bf16.msra.mxu0 %v981
        %1049 = vmatprep.subr.bf16.mxu0 %v980
        %1050 = vmatpush1.bf16.msra.mxu0 %v979
        %1051 = vmatprep.subr.bf16.mxu0 %v978
        %1052 = vmatpush1.bf16.msra.mxu0 %v977
        %1053 = vmatprep.subr.bf16.mxu0 %v976
        %1054 = vmatpush1.bf16.msra.mxu0 %v975
        %1055 = vmatprep.subr.bf16.mxu0 %v1006
        %1056 = vmatpush2.bf16.msra.mxu0 %v1005
        %1057 = vmatprep.subr.bf16.mxu0 %v1004
        %1058 = vmatpush2.bf16.msra.mxu0 %v1003
        %1059 = vmatprep.subr.bf16.mxu0 %v1002
        %1060 = vmatpush2.bf16.msra.mxu0 %v1001
        %1061 = vmatprep.subr.bf16.mxu0 %v1000
        %1062 = vmatpush2.bf16.msra.mxu0 %v999
        %1063 = vmatprep.subr.bf16.mxu0 %v998
        %1064 = vmatpush2.bf16.msra.mxu0 %v997
        %1065 = vmatprep.subr.bf16.mxu0 %v996
        %1066 = vmatpush2.bf16.msra.mxu0 %v995
        %1067 = vmatprep.subr.bf16.mxu0 %v994
        %1068 = vmatpush2.bf16.msra.mxu0 %v993
        %1069 = vmatprep.subr.bf16.mxu0 %v992
        %1070 = vmatpush2.bf16.msra.mxu0 %v991
        %1071 = vmatprep.mubr.bf16.mxu0 %v804
        %1072 = vmatmul.mubr.bf16.gmra.mxu0 %v803
        %v1073 = vpop.f32.mrf.mxu0
        %v1074 = vadd.f32 %v872, %v1073
        %v1075 = vpop.f32.mrf.mxu0
        %v1076 = vadd.f32 %v876, %v1075
        %v1077 = vpop.f32.mrf.mxu0
        %v1078 = vadd.f32 %v872, %v1077
        %v1079 = vpop.f32.mrf.mxu0
        %v1080 = vadd.f32 %v876, %v1079
        %1081 = vmatprep.mubr.bf16.mxu0 %v806
        %1082 = vmatmul.mubr.bf16.gmra.mxu0 %v805
        %v1083 = vpop.f32.mrf.mxu0
        %v1084 = vadd.f32 %v872, %v1083
        %v1085 = vpop.f32.mrf.mxu0
        %v1086 = vadd.f32 %v876, %v1085
        %v1087 = vpop.f32.mrf.mxu0
        %v1088 = vadd.f32 %v872, %v1087
        %v1089 = vpop.f32.mrf.mxu0
        %v1090 = vadd.f32 %v876, %v1089
        %1091 = vmatprep.mubr.bf16.mxu0 %v808
        %1092 = vmatmul.mubr.bf16.gmra.mxu0 %v807
        %v1093 = vpop.f32.mrf.mxu0
        %v1094 = vadd.f32 %v872, %v1093
        %v1095 = vpop.f32.mrf.mxu0
        %v1096 = vadd.f32 %v876, %v1095
        %v1097 = vpop.f32.mrf.mxu0
        %v1098 = vadd.f32 %v872, %v1097
        %v1099 = vpop.f32.mrf.mxu0
        %v1100 = vadd.f32 %v876, %v1099
        %1101 = vmatprep.mubr.bf16.mxu0 %v810
        %1102 = vmatmul.mubr.bf16.gmra.mxu0 %v809
        %v1103 = vpop.f32.mrf.mxu0
        %v1104 = vadd.f32 %v872, %v1103
        %v1105 = vpop.f32.mrf.mxu0
        %v1106 = vadd.f32 %v876, %v1105
        %v1107 = vpop.f32.mrf.mxu0
        %v1108 = vadd.f32 %v872, %v1107
        %v1109 = vpop.f32.mrf.mxu0
        %v1110 = vadd.f32 %v876, %v1109
        %1111 = vmatprep.mubr.bf16.mxu0 %v812
        %1112 = vmatmul.mubr.bf16.gmra.mxu0 %v811
        %v1113 = vpop.f32.mrf.mxu0
        %v1114 = vadd.f32 %v872, %v1113
        %v1115 = vpop.f32.mrf.mxu0
        %v1116 = vadd.f32 %v876, %v1115
        %v1117 = vpop.f32.mrf.mxu0
        %v1118 = vadd.f32 %v872, %v1117
        %v1119 = vpop.f32.mrf.mxu0
        %v1120 = vadd.f32 %v876, %v1119
        %1121 = vmatprep.mubr.bf16.mxu0 %v814
        %1122 = vmatmul.mubr.bf16.gmra.mxu0 %v813
        %v1123 = vpop.f32.mrf.mxu0
        %v1124 = vadd.f32 %v872, %v1123
        %v1125 = vpop.f32.mrf.mxu0
        %v1126 = vadd.f32 %v876, %v1125
        %v1127 = vpop.f32.mrf.mxu0
        %v1128 = vadd.f32 %v872, %v1127
        %v1129 = vpop.f32.mrf.mxu0
        %v1130 = vadd.f32 %v876, %v1129
        %1131 = vmatprep.mubr.bf16.mxu0 %v816
        %1132 = vmatmul.mubr.bf16.gmra.mxu0 %v815
        %v1133 = vpop.f32.mrf.mxu0
        %v1134 = vadd.f32 %v872, %v1133
        %v1135 = vpop.f32.mrf.mxu0
        %v1136 = vadd.f32 %v876, %v1135
        %v1137 = vpop.f32.mrf.mxu0
        %v1138 = vadd.f32 %v872, %v1137
        %v1139 = vpop.f32.mrf.mxu0
        %v1140 = vadd.f32 %v876, %v1139
        %1141 = vmatprep.mubr.bf16.mxu0 %v818
        %1142 = vmatmul.mubr.bf16.gmra.mxu0 %v817
        %v1143 = vpop.f32.mrf.mxu0
        %v1144 = vadd.f32 %v872, %v1143
        %v1145 = vpop.f32.mrf.mxu0
        %v1146 = vadd.f32 %v876, %v1145
        %v1147 = vpop.f32.mrf.mxu0
        %v1148 = vadd.f32 %v872, %v1147
        %v1149 = vpop.f32.mrf.mxu0
        %v1150 = vadd.f32 %v876, %v1149
        %1151 = vmatprep.mubr.bf16.mxu0 %v820
        %1152 = vmatmul.mubr.bf16.gmra.mxu0 %v819
        %v1153 = vpop.f32.mrf.mxu0
        %v1154 = vadd.f32 %v872, %v1153
        %v1155 = vpop.f32.mrf.mxu0
        %v1156 = vadd.f32 %v876, %v1155
        %v1157 = vpop.f32.mrf.mxu0
        %v1158 = vadd.f32 %v872, %v1157
        %v1159 = vpop.f32.mrf.mxu0
        %v1160 = vadd.f32 %v876, %v1159
        %1161 = vmatprep.mubr.bf16.mxu0 %v822
        %1162 = vmatmul.mubr.bf16.gmra.mxu0 %v821
        %v1163 = vpop.f32.mrf.mxu0
        %v1164 = vadd.f32 %v872, %v1163
        %v1165 = vpop.f32.mrf.mxu0
        %v1166 = vadd.f32 %v876, %v1165
        %v1167 = vpop.f32.mrf.mxu0
        %v1168 = vadd.f32 %v872, %v1167
        %v1169 = vpop.f32.mrf.mxu0
        %v1170 = vadd.f32 %v876, %v1169
        %1171 = vmatprep.mubr.bf16.mxu0 %v824
        %1172 = vmatmul.mubr.bf16.gmra.mxu0 %v823
        %v1173 = vpop.f32.mrf.mxu0
        %v1174 = vadd.f32 %v872, %v1173
        %v1175 = vpop.f32.mrf.mxu0
        %v1176 = vadd.f32 %v876, %v1175
        %v1177 = vpop.f32.mrf.mxu0
        %v1178 = vadd.f32 %v872, %v1177
        %v1179 = vpop.f32.mrf.mxu0
        %v1180 = vadd.f32 %v876, %v1179
        %1181 = vmatprep.mubr.bf16.mxu0 %v826
        %1182 = vmatmul.mubr.bf16.gmra.mxu0 %v825
        %v1183 = vpop.f32.mrf.mxu0
        %v1184 = vadd.f32 %v872, %v1183
        %v1185 = vpop.f32.mrf.mxu0
        %v1186 = vadd.f32 %v876, %v1185
        %v1187 = vpop.f32.mrf.mxu0
        %v1188 = vadd.f32 %v872, %v1187
        %v1189 = vpop.f32.mrf.mxu0
        %v1190 = vadd.f32 %v876, %v1189
        %1191 = vmatprep.mubr.bf16.mxu0 %v828
        %1192 = vmatmul.mubr.bf16.gmra.mxu0 %v827
        %v1193 = vpop.f32.mrf.mxu0
        %v1194 = vadd.f32 %v872, %v1193
        %v1195 = vpop.f32.mrf.mxu0
        %v1196 = vadd.f32 %v876, %v1195
        %v1197 = vpop.f32.mrf.mxu0
        %v1198 = vadd.f32 %v872, %v1197
        %v1199 = vpop.f32.mrf.mxu0
        %v1200 = vadd.f32 %v876, %v1199
        %1201 = vmatprep.mubr.bf16.mxu0 %v830
        %1202 = vmatmul.mubr.bf16.gmra.mxu0 %v829
        %v1203 = vpop.f32.mrf.mxu0
        %v1204 = vadd.f32 %v872, %v1203
        %v1205 = vpop.f32.mrf.mxu0
        %v1206 = vadd.f32 %v876, %v1205
        %v1207 = vpop.f32.mrf.mxu0
        %v1208 = vadd.f32 %v872, %v1207
        %v1209 = vpop.f32.mrf.mxu0
        %v1210 = vadd.f32 %v876, %v1209
        %1211 = vmatprep.mubr.bf16.mxu0 %v832
        %1212 = vmatmul.mubr.bf16.gmra.mxu0 %v831
        %v1213 = vpop.f32.mrf.mxu0
        %v1214 = vadd.f32 %v872, %v1213
        %v1215 = vpop.f32.mrf.mxu0
        %v1216 = vadd.f32 %v876, %v1215
        %v1217 = vpop.f32.mrf.mxu0
        %v1218 = vadd.f32 %v872, %v1217
        %v1219 = vpop.f32.mrf.mxu0
        %v1220 = vadd.f32 %v876, %v1219
        %1221 = vmatprep.mubr.bf16.mxu0 %v834
        %1222 = vmatmul.mubr.bf16.gmra.mxu0 %v833
        %v1223 = vpop.f32.mrf.mxu0
        %v1224 = vadd.f32 %v872, %v1223
        %v1225 = vpop.f32.mrf.mxu0
        %v1226 = vadd.f32 %v876, %v1225
        %v1227 = vpop.f32.mrf.mxu0
        %v1228 = vadd.f32 %v872, %v1227
        %v1229 = vpop.f32.mrf.mxu0
        %v1230 = vadd.f32 %v876, %v1229
        %1231 = vdwg.mxu0
        %v1232 = vmul.f32 %v1074, %v1074
        %v1233 = vmul.f32 %v1076, %v1076
        %v1234 = vmul.f32 %v1078, %v1078
        %v1235 = vmul.f32 %v1080, %v1080
        %v1236 = vmul.f32 %v1084, %v1084
        %v1237 = vmul.f32 %v1086, %v1086
        %v1238 = vmul.f32 %v1088, %v1088
        %v1239 = vmul.f32 %v1090, %v1090
        %v1240 = vmul.f32 %v1094, %v1094
        %v1241 = vmul.f32 %v1096, %v1096
        %v1242 = vmul.f32 %v1098, %v1098
        %v1243 = vmul.f32 %v1100, %v1100
        %v1244 = vmul.f32 %v1104, %v1104
        %v1245 = vmul.f32 %v1106, %v1106
        %v1246 = vmul.f32 %v1108, %v1108
        %v1247 = vmul.f32 %v1110, %v1110
        %v1248 = vmul.f32 %v1114, %v1114
        %v1249 = vmul.f32 %v1116, %v1116
        %v1250 = vmul.f32 %v1118, %v1118
        %v1251 = vmul.f32 %v1120, %v1120
        %v1252 = vmul.f32 %v1124, %v1124
        %v1253 = vmul.f32 %v1126, %v1126
        %v1254 = vmul.f32 %v1128, %v1128
        %v1255 = vmul.f32 %v1130, %v1130
        %v1256 = vmul.f32 %v1134, %v1134
        %v1257 = vmul.f32 %v1136, %v1136
        %v1258 = vmul.f32 %v1138, %v1138
        %v1259 = vmul.f32 %v1140, %v1140
        %v1260 = vmul.f32 %v1144, %v1144
        %v1261 = vmul.f32 %v1146, %v1146
        %v1262 = vmul.f32 %v1148, %v1148
        %v1263 = vmul.f32 %v1150, %v1150
        %v1264 = vmul.f32 %v1154, %v1154
        %v1265 = vmul.f32 %v1156, %v1156
        %v1266 = vmul.f32 %v1158, %v1158
        %v1267 = vmul.f32 %v1160, %v1160
        %v1268 = vmul.f32 %v1164, %v1164
        %v1269 = vmul.f32 %v1166, %v1166
        %v1270 = vmul.f32 %v1168, %v1168
        %v1271 = vmul.f32 %v1170, %v1170
        %v1272 = vmul.f32 %v1174, %v1174
        %v1273 = vmul.f32 %v1176, %v1176
        %v1274 = vmul.f32 %v1178, %v1178
        %v1275 = vmul.f32 %v1180, %v1180
        %v1276 = vmul.f32 %v1184, %v1184
        %v1277 = vmul.f32 %v1186, %v1186
        %v1278 = vmul.f32 %v1188, %v1188
        %v1279 = vmul.f32 %v1190, %v1190
        %v1280 = vmul.f32 %v1194, %v1194
        %v1281 = vmul.f32 %v1196, %v1196
        %v1282 = vmul.f32 %v1198, %v1198
        %v1283 = vmul.f32 %v1200, %v1200
        %v1284 = vmul.f32 %v1204, %v1204
        %v1285 = vmul.f32 %v1206, %v1206
        %v1286 = vmul.f32 %v1208, %v1208
        %v1287 = vmul.f32 %v1210, %v1210
        %v1288 = vmul.f32 %v1214, %v1214
        %v1289 = vmul.f32 %v1216, %v1216
        %v1290 = vmul.f32 %v1218, %v1218
        %v1291 = vmul.f32 %v1220, %v1220
        %v1292 = vmul.f32 %v1224, %v1224
        %v1293 = vmul.f32 %v1226, %v1226
        %v1294 = vmul.f32 %v1228, %v1228
        %v1295 = vmul.f32 %v1230, %v1230
        %v1296 = vadd.f32 %v1232, %v1233
        %1297 = vadd.xlane.f32.xlu0 %v1296
        %v1298 = vpop.xlane.xlu0 %1297
        %v1299 = vadd.f32 %v1234, %v1235
        %1300 = vadd.xlane.f32.xlu0 %v1299
        %v1301 = vpop.xlane.xlu0 %1300
        %v1302 = vadd.f32 %v1236, %v1237
        %1303 = vadd.xlane.f32.xlu0 %v1302
        %v1304 = vpop.xlane.xlu0 %1303
        %v1305 = vadd.f32 %v1238, %v1239
        %1306 = vadd.xlane.f32.xlu0 %v1305
        %v1307 = vpop.xlane.xlu0 %1306
        %v1308 = vadd.f32 %v1240, %v1241
        %1309 = vadd.xlane.f32.xlu0 %v1308
        %v1310 = vpop.xlane.xlu0 %1309
        %v1311 = vadd.f32 %v1242, %v1243
        %1312 = vadd.xlane.f32.xlu0 %v1311
        %v1313 = vpop.xlane.xlu0 %1312
        %v1314 = vadd.f32 %v1244, %v1245
        %1315 = vadd.xlane.f32.xlu0 %v1314
        %v1316 = vpop.xlane.xlu0 %1315
        %v1317 = vadd.f32 %v1246, %v1247
        %1318 = vadd.xlane.f32.xlu0 %v1317
        %v1319 = vpop.xlane.xlu0 %1318
        %v1320 = vadd.f32 %v1248, %v1249
        %1321 = vadd.xlane.f32.xlu0 %v1320
        %v1322 = vpop.xlane.xlu0 %1321
        %v1323 = vadd.f32 %v1250, %v1251
        %1324 = vadd.xlane.f32.xlu0 %v1323
        %v1325 = vpop.xlane.xlu0 %1324
        %v1326 = vadd.f32 %v1252, %v1253
        %1327 = vadd.xlane.f32.xlu0 %v1326
        %v1328 = vpop.xlane.xlu0 %1327
        %v1329 = vadd.f32 %v1254, %v1255
        %1330 = vadd.xlane.f32.xlu0 %v1329
        %v1331 = vpop.xlane.xlu0 %1330
        %v1332 = vadd.f32 %v1256, %v1257
        %1333 = vadd.xlane.f32.xlu0 %v1332
        %v1334 = vpop.xlane.xlu0 %1333
        %v1335 = vadd.f32 %v1258, %v1259
        %1336 = vadd.xlane.f32.xlu0 %v1335
        %v1337 = vpop.xlane.xlu0 %1336
        %v1338 = vadd.f32 %v1260, %v1261
        %1339 = vadd.xlane.f32.xlu0 %v1338
        %v1340 = vpop.xlane.xlu0 %1339
        %v1341 = vadd.f32 %v1262, %v1263
        %1342 = vadd.xlane.f32.xlu0 %v1341
        %v1343 = vpop.xlane.xlu0 %1342
        %v1344 = vadd.f32 %v1264, %v1265
        %1345 = vadd.xlane.f32.xlu0 %v1344
        %v1346 = vpop.xlane.xlu0 %1345
        %v1347 = vadd.f32 %v1266, %v1267
        %1348 = vadd.xlane.f32.xlu0 %v1347
        %v1349 = vpop.xlane.xlu0 %1348
        %v1350 = vadd.f32 %v1268, %v1269
        %1351 = vadd.xlane.f32.xlu0 %v1350
        %v1352 = vpop.xlane.xlu0 %1351
        %v1353 = vadd.f32 %v1270, %v1271
        %1354 = vadd.xlane.f32.xlu0 %v1353
        %v1355 = vpop.xlane.xlu0 %1354
        %v1356 = vadd.f32 %v1272, %v1273
        %1357 = vadd.xlane.f32.xlu0 %v1356
        %v1358 = vpop.xlane.xlu0 %1357
        %v1359 = vadd.f32 %v1274, %v1275
        %1360 = vadd.xlane.f32.xlu0 %v1359
        %v1361 = vpop.xlane.xlu0 %1360
        %v1362 = vadd.f32 %v1276, %v1277
        %1363 = vadd.xlane.f32.xlu0 %v1362
        %v1364 = vpop.xlane.xlu0 %1363
        %v1365 = vadd.f32 %v1278, %v1279
        %1366 = vadd.xlane.f32.xlu0 %v1365
        %v1367 = vpop.xlane.xlu0 %1366
        %v1368 = vadd.f32 %v1280, %v1281
        %1369 = vadd.xlane.f32.xlu0 %v1368
        %v1370 = vpop.xlane.xlu0 %1369
        %v1371 = vadd.f32 %v1282, %v1283
        %1372 = vadd.xlane.f32.xlu0 %v1371
        %v1373 = vpop.xlane.xlu0 %1372
        %v1374 = vadd.f32 %v1284, %v1285
        %1375 = vadd.xlane.f32.xlu0 %v1374
        %v1376 = vpop.xlane.xlu0 %1375
        %v1377 = vadd.f32 %v1286, %v1287
        %1378 = vadd.xlane.f32.xlu0 %v1377
        %v1379 = vpop.xlane.xlu0 %1378
        %v1380 = vadd.f32 %v1288, %v1289
        %1381 = vadd.xlane.f32.xlu0 %v1380
        %v1382 = vpop.xlane.xlu0 %1381
        %v1383 = vadd.f32 %v1290, %v1291
        %1384 = vadd.xlane.f32.xlu0 %v1383
        %v1385 = vpop.xlane.xlu0 %1384
        %v1386 = vadd.f32 %v1292, %v1293
        %1387 = vadd.xlane.f32.xlu0 %v1386
        %v1388 = vpop.xlane.xlu0 %1387
        %v1389 = vadd.f32 %v1294, %v1295
        %1390 = vadd.xlane.f32.xlu0 %v1389
        %v1391 = vpop.xlane.xlu0 %1390
        %v1392 = vrsqrt.pop %v1298
        %v1393 = vmul.f32 %v1298, %v1392
        %vm1394 = vcmp.eq.f32.partialorder %v1298, inf
        %v1395 = vsel %vm1394, %v1298, %v1393
        %vm1396 = vcmp.eq.f32.partialorder %v1298, 0.0
        %v1397 = vand.u32 %v1298, 2147483648
        %v1398 = vsel %vm1396, %v1397, %v1395
        %v1399 = vrsqrt.pop %v1301
        %v1400 = vmul.f32 %v1301, %v1399
        %vm1401 = vcmp.eq.f32.partialorder %v1301, inf
        %v1402 = vsel %vm1401, %v1301, %v1400
        %vm1403 = vcmp.eq.f32.partialorder %v1301, 0.0
        %v1404 = vand.u32 %v1301, 2147483648
        %v1405 = vsel %vm1403, %v1404, %v1402
        %v1406 = vrsqrt.pop %v1304
        %v1407 = vmul.f32 %v1304, %v1406
        %vm1408 = vcmp.eq.f32.partialorder %v1304, inf
        %v1409 = vsel %vm1408, %v1304, %v1407
        %vm1410 = vcmp.eq.f32.partialorder %v1304, 0.0
        %v1411 = vand.u32 %v1304, 2147483648
        %v1412 = vsel %vm1410, %v1411, %v1409
        %v1413 = vrsqrt.pop %v1307
        %v1414 = vmul.f32 %v1307, %v1413
        %vm1415 = vcmp.eq.f32.partialorder %v1307, inf
        %v1416 = vsel %vm1415, %v1307, %v1414
        %vm1417 = vcmp.eq.f32.partialorder %v1307, 0.0
        %v1418 = vand.u32 %v1307, 2147483648
        %v1419 = vsel %vm1417, %v1418, %v1416
        %v1420 = vrsqrt.pop %v1310
        %v1421 = vmul.f32 %v1310, %v1420
        %vm1422 = vcmp.eq.f32.partialorder %v1310, inf
        %v1423 = vsel %vm1422, %v1310, %v1421
        %vm1424 = vcmp.eq.f32.partialorder %v1310, 0.0
        %v1425 = vand.u32 %v1310, 2147483648
        %v1426 = vsel %vm1424, %v1425, %v1423
        %v1427 = vrsqrt.pop %v1313
        %v1428 = vmul.f32 %v1313, %v1427
        %vm1429 = vcmp.eq.f32.partialorder %v1313, inf
        %v1430 = vsel %vm1429, %v1313, %v1428
        %vm1431 = vcmp.eq.f32.partialorder %v1313, 0.0
        %v1432 = vand.u32 %v1313, 2147483648
        %v1433 = vsel %vm1431, %v1432, %v1430
        %v1434 = vrsqrt.pop %v1316
        %v1435 = vmul.f32 %v1316, %v1434
        %vm1436 = vcmp.eq.f32.partialorder %v1316, inf
        %v1437 = vsel %vm1436, %v1316, %v1435
        %vm1438 = vcmp.eq.f32.partialorder %v1316, 0.0
        %v1439 = vand.u32 %v1316, 2147483648
        %v1440 = vsel %vm1438, %v1439, %v1437
        %v1441 = vrsqrt.pop %v1319
        %v1442 = vmul.f32 %v1319, %v1441
        %vm1443 = vcmp.eq.f32.partialorder %v1319, inf
        %v1444 = vsel %vm1443, %v1319, %v1442
        %vm1445 = vcmp.eq.f32.partialorder %v1319, 0.0
        %v1446 = vand.u32 %v1319, 2147483648
        %v1447 = vsel %vm1445, %v1446, %v1444
        %v1448 = vrsqrt.pop %v1322
        %v1449 = vmul.f32 %v1322, %v1448
        %vm1450 = vcmp.eq.f32.partialorder %v1322, inf
        %v1451 = vsel %vm1450, %v1322, %v1449
        %vm1452 = vcmp.eq.f32.partialorder %v1322, 0.0
        %v1453 = vand.u32 %v1322, 2147483648
        %v1454 = vsel %vm1452, %v1453, %v1451
        %v1455 = vrsqrt.pop %v1325
        %v1456 = vmul.f32 %v1325, %v1455
        %vm1457 = vcmp.eq.f32.partialorder %v1325, inf
        %v1458 = vsel %vm1457, %v1325, %v1456
        %vm1459 = vcmp.eq.f32.partialorder %v1325, 0.0
        %v1460 = vand.u32 %v1325, 2147483648
        %v1461 = vsel %vm1459, %v1460, %v1458
        %v1462 = vrsqrt.pop %v1328
        %v1463 = vmul.f32 %v1328, %v1462
        %vm1464 = vcmp.eq.f32.partialorder %v1328, inf
        %v1465 = vsel %vm1464, %v1328, %v1463
        %vm1466 = vcmp.eq.f32.partialorder %v1328, 0.0
        %v1467 = vand.u32 %v1328, 2147483648
        %v1468 = vsel %vm1466, %v1467, %v1465
        %v1469 = vrsqrt.pop %v1331
        %v1470 = vmul.f32 %v1331, %v1469
        %vm1471 = vcmp.eq.f32.partialorder %v1331, inf
        %v1472 = vsel %vm1471, %v1331, %v1470
        %vm1473 = vcmp.eq.f32.partialorder %v1331, 0.0
        %v1474 = vand.u32 %v1331, 2147483648
        %v1475 = vsel %vm1473, %v1474, %v1472
        %v1476 = vrsqrt.pop %v1334
        %v1477 = vmul.f32 %v1334, %v1476
        %vm1478 = vcmp.eq.f32.partialorder %v1334, inf
        %v1479 = vsel %vm1478, %v1334, %v1477
        %vm1480 = vcmp.eq.f32.partialorder %v1334, 0.0
        %v1481 = vand.u32 %v1334, 2147483648
        %v1482 = vsel %vm1480, %v1481, %v1479
        %v1483 = vrsqrt.pop %v1337
        %v1484 = vmul.f32 %v1337, %v1483
        %vm1485 = vcmp.eq.f32.partialorder %v1337, inf
        %v1486 = vsel %vm1485, %v1337, %v1484
        %vm1487 = vcmp.eq.f32.partialorder %v1337, 0.0
        %v1488 = vand.u32 %v1337, 2147483648
        %v1489 = vsel %vm1487, %v1488, %v1486
        %v1490 = vrsqrt.pop %v1340
        %v1491 = vmul.f32 %v1340, %v1490
        %vm1492 = vcmp.eq.f32.partialorder %v1340, inf
        %v1493 = vsel %vm1492, %v1340, %v1491
        %vm1494 = vcmp.eq.f32.partialorder %v1340, 0.0
        %v1495 = vand.u32 %v1340, 2147483648
        %v1496 = vsel %vm1494, %v1495, %v1493
        %v1497 = vrsqrt.pop %v1343
        %v1498 = vmul.f32 %v1343, %v1497
        %vm1499 = vcmp.eq.f32.partialorder %v1343, inf
        %v1500 = vsel %vm1499, %v1343, %v1498
        %vm1501 = vcmp.eq.f32.partialorder %v1343, 0.0
        %v1502 = vand.u32 %v1343, 2147483648
        %v1503 = vsel %vm1501, %v1502, %v1500
        %v1504 = vrsqrt.pop %v1346
        %v1505 = vmul.f32 %v1346, %v1504
        %vm1506 = vcmp.eq.f32.partialorder %v1346, inf
        %v1507 = vsel %vm1506, %v1346, %v1505
        %vm1508 = vcmp.eq.f32.partialorder %v1346, 0.0
        %v1509 = vand.u32 %v1346, 2147483648
        %v1510 = vsel %vm1508, %v1509, %v1507
        %v1511 = vrsqrt.pop %v1349
        %v1512 = vmul.f32 %v1349, %v1511
        %vm1513 = vcmp.eq.f32.partialorder %v1349, inf
        %v1514 = vsel %vm1513, %v1349, %v1512
        %vm1515 = vcmp.eq.f32.partialorder %v1349, 0.0
        %v1516 = vand.u32 %v1349, 2147483648
        %v1517 = vsel %vm1515, %v1516, %v1514
        %v1518 = vrsqrt.pop %v1352
        %v1519 = vmul.f32 %v1352, %v1518
        %vm1520 = vcmp.eq.f32.partialorder %v1352, inf
        %v1521 = vsel %vm1520, %v1352, %v1519
        %vm1522 = vcmp.eq.f32.partialorder %v1352, 0.0
        %v1523 = vand.u32 %v1352, 2147483648
        %v1524 = vsel %vm1522, %v1523, %v1521
        %v1525 = vrsqrt.pop %v1355
        %v1526 = vmul.f32 %v1355, %v1525
        %vm1527 = vcmp.eq.f32.partialorder %v1355, inf
        %v1528 = vsel %vm1527, %v1355, %v1526
        %vm1529 = vcmp.eq.f32.partialorder %v1355, 0.0
        %v1530 = vand.u32 %v1355, 2147483648
        %v1531 = vsel %vm1529, %v1530, %v1528
        %v1532 = vrsqrt.pop %v1358
        %v1533 = vmul.f32 %v1358, %v1532
        %vm1534 = vcmp.eq.f32.partialorder %v1358, inf
        %v1535 = vsel %vm1534, %v1358, %v1533
        %vm1536 = vcmp.eq.f32.partialorder %v1358, 0.0
        %v1537 = vand.u32 %v1358, 2147483648
        %v1538 = vsel %vm1536, %v1537, %v1535
        %v1539 = vrsqrt.pop %v1361
        %v1540 = vmul.f32 %v1361, %v1539
        %vm1541 = vcmp.eq.f32.partialorder %v1361, inf
        %v1542 = vsel %vm1541, %v1361, %v1540
        %vm1543 = vcmp.eq.f32.partialorder %v1361, 0.0
        %v1544 = vand.u32 %v1361, 2147483648
        %v1545 = vsel %vm1543, %v1544, %v1542
        %v1546 = vrsqrt.pop %v1364
        %v1547 = vmul.f32 %v1364, %v1546
        %vm1548 = vcmp.eq.f32.partialorder %v1364, inf
        %v1549 = vsel %vm1548, %v1364, %v1547
        %vm1550 = vcmp.eq.f32.partialorder %v1364, 0.0
        %v1551 = vand.u32 %v1364, 2147483648
        %v1552 = vsel %vm1550, %v1551, %v1549
        %v1553 = vrsqrt.pop %v1367
        %v1554 = vmul.f32 %v1367, %v1553
        %vm1555 = vcmp.eq.f32.partialorder %v1367, inf
        %v1556 = vsel %vm1555, %v1367, %v1554
        %vm1557 = vcmp.eq.f32.partialorder %v1367, 0.0
        %v1558 = vand.u32 %v1367, 2147483648
        %v1559 = vsel %vm1557, %v1558, %v1556
        %v1560 = vrsqrt.pop %v1370
        %v1561 = vmul.f32 %v1370, %v1560
        %vm1562 = vcmp.eq.f32.partialorder %v1370, inf
        %v1563 = vsel %vm1562, %v1370, %v1561
        %vm1564 = vcmp.eq.f32.partialorder %v1370, 0.0
        %v1565 = vand.u32 %v1370, 2147483648
        %v1566 = vsel %vm1564, %v1565, %v1563
        %v1567 = vrsqrt.pop %v1373
        %v1568 = vmul.f32 %v1373, %v1567
        %vm1569 = vcmp.eq.f32.partialorder %v1373, inf
        %v1570 = vsel %vm1569, %v1373, %v1568
        %vm1571 = vcmp.eq.f32.partialorder %v1373, 0.0
        %v1572 = vand.u32 %v1373, 2147483648
        %v1573 = vsel %vm1571, %v1572, %v1570
        %v1574 = vrsqrt.pop %v1376
        %v1575 = vmul.f32 %v1376, %v1574
        %vm1576 = vcmp.eq.f32.partialorder %v1376, inf
        %v1577 = vsel %vm1576, %v1376, %v1575
        %vm1578 = vcmp.eq.f32.partialorder %v1376, 0.0
        %v1579 = vand.u32 %v1376, 2147483648
        %v1580 = vsel %vm1578, %v1579, %v1577
        %v1581 = vrsqrt.pop %v1379
        %v1582 = vmul.f32 %v1379, %v1581
        %vm1583 = vcmp.eq.f32.partialorder %v1379, inf
        %v1584 = vsel %vm1583, %v1379, %v1582
        %vm1585 = vcmp.eq.f32.partialorder %v1379, 0.0
        %v1586 = vand.u32 %v1379, 2147483648
        %v1587 = vsel %vm1585, %v1586, %v1584
        %v1588 = vrsqrt.pop %v1382
        %v1589 = vmul.f32 %v1382, %v1588
        %vm1590 = vcmp.eq.f32.partialorder %v1382, inf
        %v1591 = vsel %vm1590, %v1382, %v1589
        %vm1592 = vcmp.eq.f32.partialorder %v1382, 0.0
        %v1593 = vand.u32 %v1382, 2147483648
        %v1594 = vsel %vm1592, %v1593, %v1591
        %v1595 = vrsqrt.pop %v1385
        %v1596 = vmul.f32 %v1385, %v1595
        %vm1597 = vcmp.eq.f32.partialorder %v1385, inf
        %v1598 = vsel %vm1597, %v1385, %v1596
        %vm1599 = vcmp.eq.f32.partialorder %v1385, 0.0
        %v1600 = vand.u32 %v1385, 2147483648
        %v1601 = vsel %vm1599, %v1600, %v1598
        %v1602 = vrsqrt.pop %v1388
        %v1603 = vmul.f32 %v1388, %v1602
        %vm1604 = vcmp.eq.f32.partialorder %v1388, inf
        %v1605 = vsel %vm1604, %v1388, %v1603
        %vm1606 = vcmp.eq.f32.partialorder %v1388, 0.0
        %v1607 = vand.u32 %v1388, 2147483648
        %v1608 = vsel %vm1606, %v1607, %v1605
        %v1609 = vrsqrt.pop %v1391
        %v1610 = vmul.f32 %v1391, %v1609
        %vm1611 = vcmp.eq.f32.partialorder %v1391, inf
        %v1612 = vsel %vm1611, %v1391, %v1610
        %vm1613 = vcmp.eq.f32.partialorder %v1391, 0.0
        %v1614 = vand.u32 %v1391, 2147483648
        %v1615 = vsel %vm1613, %v1614, %v1612
        %v1616 = vadd.f32 %v1398, 1e-07
        %v1617 = vadd.f32 %v1405, 1e-07
        %v1618 = vadd.f32 %v1412, 1e-07
        %v1619 = vadd.f32 %v1419, 1e-07
        %v1620 = vadd.f32 %v1426, 1e-07
        %v1621 = vadd.f32 %v1433, 1e-07
        %v1622 = vadd.f32 %v1440, 1e-07
        %v1623 = vadd.f32 %v1447, 1e-07
        %v1624 = vadd.f32 %v1454, 1e-07
        %v1625 = vadd.f32 %v1461, 1e-07
        %v1626 = vadd.f32 %v1468, 1e-07
        %v1627 = vadd.f32 %v1475, 1e-07
        %v1628 = vadd.f32 %v1482, 1e-07
        %v1629 = vadd.f32 %v1489, 1e-07
        %v1630 = vadd.f32 %v1496, 1e-07
        %v1631 = vadd.f32 %v1503, 1e-07
        %v1632 = vadd.f32 %v1510, 1e-07
        %v1633 = vadd.f32 %v1517, 1e-07
        %v1634 = vadd.f32 %v1524, 1e-07
        %v1635 = vadd.f32 %v1531, 1e-07
        %v1636 = vadd.f32 %v1538, 1e-07
        %v1637 = vadd.f32 %v1545, 1e-07
        %v1638 = vadd.f32 %v1552, 1e-07
        %v1639 = vadd.f32 %v1559, 1e-07
        %v1640 = vadd.f32 %v1566, 1e-07
        %v1641 = vadd.f32 %v1573, 1e-07
        %v1642 = vadd.f32 %v1580, 1e-07
        %v1643 = vadd.f32 %v1587, 1e-07
        %v1644 = vadd.f32 %v1594, 1e-07
        %v1645 = vadd.f32 %v1601, 1e-07
        %v1646 = vadd.f32 %v1608, 1e-07
        %v1647 = vadd.f32 %v1615, 1e-07
        %v1648 = vrcp.pop %v1616
        %v1649 = vrcp.pop %v1617
        %v1650 = vrcp.pop %v1618
        %v1651 = vrcp.pop %v1619
        %v1652 = vrcp.pop %v1620
        %v1653 = vrcp.pop %v1621
        %v1654 = vrcp.pop %v1622
        %v1655 = vrcp.pop %v1623
        %v1656 = vrcp.pop %v1624
        %v1657 = vrcp.pop %v1625
        %v1658 = vrcp.pop %v1626
        %v1659 = vrcp.pop %v1627
        %v1660 = vrcp.pop %v1628
        %v1661 = vrcp.pop %v1629
        %v1662 = vrcp.pop %v1630
        %v1663 = vrcp.pop %v1631
        %v1664 = vrcp.pop %v1632
        %v1665 = vrcp.pop %v1633
        %v1666 = vrcp.pop %v1634
        %v1667 = vrcp.pop %v1635
        %v1668 = vrcp.pop %v1636
        %v1669 = vrcp.pop %v1637
        %v1670 = vrcp.pop %v1638
        %v1671 = vrcp.pop %v1639
        %v1672 = vrcp.pop %v1640
        %v1673 = vrcp.pop %v1641
        %v1674 = vrcp.pop %v1642
        %v1675 = vrcp.pop %v1643
        %v1676 = vrcp.pop %v1644
        %v1677 = vrcp.pop %v1645
        %v1678 = vrcp.pop %v1646
        %v1679 = vrcp.pop %v1647
        %v1680 = vmul.f32 %v1074, %v1648
        %v1681 = vmul.f32 %v1076, %v1648
        %v1682 = vmul.f32 %v1078, %v1649
        %v1683 = vmul.f32 %v1080, %v1649
        %v1684 = vmul.f32 %v1084, %v1650
        %v1685 = vmul.f32 %v1086, %v1650
        %v1686 = vmul.f32 %v1088, %v1651
        %v1687 = vmul.f32 %v1090, %v1651
        %v1688 = vmul.f32 %v1094, %v1652
        %v1689 = vmul.f32 %v1096, %v1652
        %v1690 = vmul.f32 %v1098, %v1653
        %v1691 = vmul.f32 %v1100, %v1653
        %v1692 = vmul.f32 %v1104, %v1654
        %v1693 = vmul.f32 %v1106, %v1654
        %v1694 = vmul.f32 %v1108, %v1655
        %v1695 = vmul.f32 %v1110, %v1655
        %v1696 = vmul.f32 %v1114, %v1656
        %v1697 = vmul.f32 %v1116, %v1656
        %v1698 = vmul.f32 %v1118, %v1657
        %v1699 = vmul.f32 %v1120, %v1657
        %v1700 = vmul.f32 %v1124, %v1658
        %v1701 = vmul.f32 %v1126, %v1658
        %v1702 = vmul.f32 %v1128, %v1659
        %v1703 = vmul.f32 %v1130, %v1659
        %v1704 = vmul.f32 %v1134, %v1660
        %v1705 = vmul.f32 %v1136, %v1660
        %v1706 = vmul.f32 %v1138, %v1661
        %v1707 = vmul.f32 %v1140, %v1661
        %v1708 = vmul.f32 %v1144, %v1662
        %v1709 = vmul.f32 %v1146, %v1662
        %v1710 = vmul.f32 %v1148, %v1663
        %v1711 = vmul.f32 %v1150, %v1663
        %v1712 = vmul.f32 %v1154, %v1664
        %v1713 = vmul.f32 %v1156, %v1664
        %v1714 = vmul.f32 %v1158, %v1665
        %v1715 = vmul.f32 %v1160, %v1665
        %v1716 = vmul.f32 %v1164, %v1666
        %v1717 = vmul.f32 %v1166, %v1666
        %v1718 = vmul.f32 %v1168, %v1667
        %v1719 = vmul.f32 %v1170, %v1667
        %v1720 = vmul.f32 %v1174, %v1668
        %v1721 = vmul.f32 %v1176, %v1668
        %v1722 = vmul.f32 %v1178, %v1669
        %v1723 = vmul.f32 %v1180, %v1669
        %v1724 = vmul.f32 %v1184, %v1670
        %v1725 = vmul.f32 %v1186, %v1670
        %v1726 = vmul.f32 %v1188, %v1671
        %v1727 = vmul.f32 %v1190, %v1671
        %v1728 = vmul.f32 %v1194, %v1672
        %v1729 = vmul.f32 %v1196, %v1672
        %v1730 = vmul.f32 %v1198, %v1673
        %v1731 = vmul.f32 %v1200, %v1673
        %v1732 = vmul.f32 %v1204, %v1674
        %v1733 = vmul.f32 %v1206, %v1674
        %v1734 = vmul.f32 %v1208, %v1675
        %v1735 = vmul.f32 %v1210, %v1675
        %v1736 = vmul.f32 %v1214, %v1676
        %v1737 = vmul.f32 %v1216, %v1676
        %v1738 = vmul.f32 %v1218, %v1677
        %v1739 = vmul.f32 %v1220, %v1677
        %v1740 = vmul.f32 %v1224, %v1678
        %v1741 = vmul.f32 %v1226, %v1678
        %v1742 = vmul.f32 %v1228, %v1679
        %v1743 = vmul.f32 %v1230, %v1679
        %v1744 = vpack.c.bf16 %v1682, %v1680
        %v1745 = vpack.c.bf16 %v1683, %v1681
        %v1746 = vpack.c.bf16 %v1686, %v1684
        %v1747 = vpack.c.bf16 %v1687, %v1685
        %v1748 = vpack.c.bf16 %v1690, %v1688
        %v1749 = vpack.c.bf16 %v1691, %v1689
        %v1750 = vpack.c.bf16 %v1694, %v1692
        %v1751 = vpack.c.bf16 %v1695, %v1693
        %v1752 = vpack.c.bf16 %v1698, %v1696
        %v1753 = vpack.c.bf16 %v1699, %v1697
        %v1754 = vpack.c.bf16 %v1702, %v1700
        %v1755 = vpack.c.bf16 %v1703, %v1701
        %v1756 = vpack.c.bf16 %v1706, %v1704
        %v1757 = vpack.c.bf16 %v1707, %v1705
        %v1758 = vpack.c.bf16 %v1710, %v1708
        %v1759 = vpack.c.bf16 %v1711, %v1709
        %v1760 = vpack.c.bf16 %v1714, %v1712
        %v1761 = vpack.c.bf16 %v1715, %v1713
        %v1762 = vpack.c.bf16 %v1718, %v1716
        %v1763 = vpack.c.bf16 %v1719, %v1717
        %v1764 = vpack.c.bf16 %v1722, %v1720
        %v1765 = vpack.c.bf16 %v1723, %v1721
        %v1766 = vpack.c.bf16 %v1726, %v1724
        %v1767 = vpack.c.bf16 %v1727, %v1725
        %v1768 = vpack.c.bf16 %v1730, %v1728
        %v1769 = vpack.c.bf16 %v1731, %v1729
        %v1770 = vpack.c.bf16 %v1734, %v1732
        %v1771 = vpack.c.bf16 %v1735, %v1733
        %v1772 = vpack.c.bf16 %v1738, %v1736
        %v1773 = vpack.c.bf16 %v1739, %v1737
        %v1774 = vpack.c.bf16 %v1742, %v1740
        %v1775 = vpack.c.bf16 %v1743, %v1741
        %v1808 = vunpack.c.l.b16 %v1744
        %v1809 = vunpack.c.l.b16 %v1745
        %v1810 = vunpack.c.h.b16 %v1744
        %v1811 = vunpack.c.h.b16 %v1745
        %v1812 = vunpack.c.l.b16 %v1746
        %v1813 = vunpack.c.l.b16 %v1747
        %v1814 = vunpack.c.h.b16 %v1746
        %v1815 = vunpack.c.h.b16 %v1747
        %v1816 = vunpack.c.l.b16 %v1748
        %v1817 = vunpack.c.l.b16 %v1749
        %v1818 = vunpack.c.h.b16 %v1748
        %v1819 = vunpack.c.h.b16 %v1749
        %v1820 = vunpack.c.l.b16 %v1750
        %v1821 = vunpack.c.l.b16 %v1751
        %v1822 = vunpack.c.h.b16 %v1750
        %v1823 = vunpack.c.h.b16 %v1751
        %v1824 = vunpack.c.l.b16 %v1752
        %v1825 = vunpack.c.l.b16 %v1753
        %v1826 = vunpack.c.h.b16 %v1752
        %v1827 = vunpack.c.h.b16 %v1753
        %v1828 = vunpack.c.l.b16 %v1754
        %v1829 = vunpack.c.l.b16 %v1755
        %v1830 = vunpack.c.h.b16 %v1754
        %v1831 = vunpack.c.h.b16 %v1755
        %v1832 = vunpack.c.l.b16 %v1756
        %v1833 = vunpack.c.l.b16 %v1757
        %v1834 = vunpack.c.h.b16 %v1756
        %v1835 = vunpack.c.h.b16 %v1757
        %v1836 = vunpack.c.l.b16 %v1758
        %v1837 = vunpack.c.l.b16 %v1759
        %v1838 = vunpack.c.h.b16 %v1758
        %v1839 = vunpack.c.h.b16 %v1759
        %v1840 = vunpack.c.l.b16 %v1760
        %v1841 = vunpack.c.l.b16 %v1761
        %v1842 = vunpack.c.h.b16 %v1760
        %v1843 = vunpack.c.h.b16 %v1761
        %v1844 = vunpack.c.l.b16 %v1762
        %v1845 = vunpack.c.l.b16 %v1763
        %v1846 = vunpack.c.h.b16 %v1762
        %v1847 = vunpack.c.h.b16 %v1763
        %v1848 = vunpack.c.l.b16 %v1764
        %v1849 = vunpack.c.l.b16 %v1765
        %v1850 = vunpack.c.h.b16 %v1764
        %v1851 = vunpack.c.h.b16 %v1765
        %v1852 = vunpack.c.l.b16 %v1766
        %v1853 = vunpack.c.l.b16 %v1767
        %v1854 = vunpack.c.h.b16 %v1766
        %v1855 = vunpack.c.h.b16 %v1767
        %v1856 = vunpack.c.l.b16 %v1768
        %v1857 = vunpack.c.l.b16 %v1769
        %v1858 = vunpack.c.h.b16 %v1768
        %v1859 = vunpack.c.h.b16 %v1769
        %v1860 = vunpack.c.l.b16 %v1770
        %v1861 = vunpack.c.l.b16 %v1771
        %v1862 = vunpack.c.h.b16 %v1770
        %v1863 = vunpack.c.h.b16 %v1771
        %v1864 = vunpack.c.l.b16 %v1772
        %v1865 = vunpack.c.l.b16 %v1773
        %v1866 = vunpack.c.h.b16 %v1772
        %v1867 = vunpack.c.h.b16 %v1773
        %v1868 = vunpack.c.l.b16 %v1774
        %v1869 = vunpack.c.l.b16 %v1775
        %v1870 = vunpack.c.h.b16 %v1774
        %v1871 = vunpack.c.h.b16 %v1775
        %v1872 = vpack.c.b16 %v1809, %v1808
        %v1873 = vpack.c.b16 %v1811, %v1810
        %v1874 = vpack.c.b16 %v1813, %v1812
        %v1875 = vpack.c.b16 %v1815, %v1814
        %v1876 = vpack.c.b16 %v1817, %v1816
        %v1877 = vpack.c.b16 %v1819, %v1818
        %v1878 = vpack.c.b16 %v1821, %v1820
        %v1879 = vpack.c.b16 %v1823, %v1822
        %v1880 = vpack.c.b16 %v1825, %v1824
        %v1881 = vpack.c.b16 %v1827, %v1826
        %v1882 = vpack.c.b16 %v1829, %v1828
        %v1883 = vpack.c.b16 %v1831, %v1830
        %v1884 = vpack.c.b16 %v1833, %v1832
        %v1885 = vpack.c.b16 %v1835, %v1834
        %v1886 = vpack.c.b16 %v1837, %v1836
        %v1887 = vpack.c.b16 %v1839, %v1838
        %v1888 = vpack.c.b16 %v1841, %v1840
        %v1889 = vpack.c.b16 %v1843, %v1842
        %v1890 = vpack.c.b16 %v1845, %v1844
        %v1891 = vpack.c.b16 %v1847, %v1846
        %v1892 = vpack.c.b16 %v1849, %v1848
        %v1893 = vpack.c.b16 %v1851, %v1850
        %v1894 = vpack.c.b16 %v1853, %v1852
        %v1895 = vpack.c.b16 %v1855, %v1854
        %v1896 = vpack.c.b16 %v1857, %v1856
        %v1897 = vpack.c.b16 %v1859, %v1858
        %v1898 = vpack.c.b16 %v1861, %v1860
        %v1899 = vpack.c.b16 %v1863, %v1862
        %v1900 = vpack.c.b16 %v1865, %v1864
        %v1901 = vpack.c.b16 %v1867, %v1866
        %v1902 = vpack.c.b16 %v1869, %v1868
        %v1903 = vpack.c.b16 %v1871, %v1870
        %1936 = vst [vmem:[%s323] sm:$0xff] %v1872
        %1937 = vst [vmem:[%s323 + $0x8] sm:$0xff] %v1873
        %1938 = vst [vmem:[%s323 + $0x10] sm:$0xff] %v1874
        %1939 = vst [vmem:[%s323 + $0x18] sm:$0xff] %v1875
        %1940 = vst [vmem:[%s323 + $0x20] sm:$0xff] %v1876
        %1941 = vst [vmem:[%s323 + $0x28] sm:$0xff] %v1877
        %1942 = vst [vmem:[%s323 + $0x30] sm:$0xff] %v1878
        %1943 = vst [vmem:[%s323 + $0x38] sm:$0xff] %v1879
        %1944 = vst [vmem:[%s323 + $0x40] sm:$0xff] %v1880
        %1945 = vst [vmem:[%s323 + $0x48] sm:$0xff] %v1881
        %1946 = vst [vmem:[%s323 + $0x50] sm:$0xff] %v1882
        %1947 = vst [vmem:[%s323 + $0x58] sm:$0xff] %v1883
        %1948 = vst [vmem:[%s323 + $0x60] sm:$0xff] %v1884
        %1949 = vst [vmem:[%s323 + $0x68] sm:$0xff] %v1885
        %1950 = vst [vmem:[%s323 + $0x70] sm:$0xff] %v1886
        %1951 = vst [vmem:[%s323 + $0x78] sm:$0xff] %v1887
        %1952 = vst [vmem:[%s323 + $0x80] sm:$0xff] %v1888
        %1953 = vst [vmem:[%s323 + $0x88] sm:$0xff] %v1889
        %1954 = vst [vmem:[%s323 + $0x90] sm:$0xff] %v1890
        %1955 = vst [vmem:[%s323 + $0x98] sm:$0xff] %v1891
        %1956 = vst [vmem:[%s323 + $0xa0] sm:$0xff] %v1892
        %1957 = vst [vmem:[%s323 + $0xa8] sm:$0xff] %v1893
        %1958 = vst [vmem:[%s323 + $0xb0] sm:$0xff] %v1894
        %1959 = vst [vmem:[%s323 + $0xb8] sm:$0xff] %v1895
        %1960 = vst [vmem:[%s323 + $0xc0] sm:$0xff] %v1896
        %1961 = vst [vmem:[%s323 + $0xc8] sm:$0xff] %v1897
        %1962 = vst [vmem:[%s323 + $0xd0] sm:$0xff] %v1898
        %1963 = vst [vmem:[%s323 + $0xd8] sm:$0xff] %v1899
        %1964 = vst [vmem:[%s323 + $0xe0] sm:$0xff] %v1900
        %1965 = vst [vmem:[%s323 + $0xe8] sm:$0xff] %v1901
        %1966 = vst [vmem:[%s323 + $0xf0] sm:$0xff] %v1902
        %1967 = vst [vmem:[%s323 + $0xf8] sm:$0xff] %v1903
        %s1968 = sand.u32 %s176, 1
        %s1969 = scalar_lea.sflag [#allocation4], %s1968
        %s1970 = sand.u32 %s176, 1
        %s1971 = smul.addr %s1970, 256
        %s1972 = scalar_lea.vmem [#allocation5], %s1971
        // Predicated region
        $region45: #{_forward_stacked.1} parent=39 // pred_check
          %p1973 = pneg %p186
        $region46: #{_forward_stacked.1} parent=39 // pred_check_branch
          %1975 = sbr.rel (%p1973) target = $region48
        $region47: #{_forward_stacked.1} parent=39 // pred_region
          %s1976 = smul.u32 32, %s27
          %s1978 = ssub.s32 4096, 4096
          %1979 = vsyncadd %s1969, %s1978
          %s1980 = smul.addr %s1976, 2
          %s1981 = smul.addr %s26, 64
          %s1982 = sadd.s32 %s1980, %s1981
          %s1983 = smul.addr %s1982, 64
          %s1984 = scalar_lea.hbm %s5, %s1983
          %s1985 = sshll.u32 %s1972, 4
          %s1986 = int_to_ptr.vmem [resolvable:$true] %s1985
          %1991 = dma.vmem_to_hbm [thread:$0]  %s1986, 4096, %s1984, %s1969, 128, 128, 8
        $region48: #{_forward_stacked.1} parent=39 // pred_fallthru
          _
      $region40: #{_forward_stacked.1} parent=5 // pred_fallthru
        _
      %p1992 = scmp.le.s32.totalorder 2, %s17
      // Predicated region
      $region49: #{_forward_stacked.1} parent=5 // pred_check
        %p1993 = pneg %p1992
      $region50: #{_forward_stacked.1} parent=5 // pred_check_branch
        %1995 = sbr.rel (%p1993) target = $region52
      $region51: #{_forward_stacked.1} parent=5 // pred_region
        %s1996 = ssub.s32 %s17, 2
        // Predicated region
        $region53: #{_forward_stacked.1} parent=51 // pred_check
          %p1997 = pneg %p192
        $region54: #{_forward_stacked.1} parent=51 // pred_check_branch
          %1999 = sbr.rel (%p1997) target = $region56
        $region55: #{_forward_stacked.1} parent=51 // pred_region
          %s2000 = sand.u32 %s177, 1
          %s2001 = scalar_lea.sflag [#allocation4], %s2000
          %s2002 = sand.u32 %s177, 1
          %s2003 = smul.addr %s2002, 256
          %s2004 = scalar_lea.vmem [#allocation5], %s2003
          %2005 = dma.done %s2001, 4096
        $region56: #{_forward_stacked.1} parent=51 // pred_fallthru
          _
      $region52: #{_forward_stacked.1} parent=5 // pred_fallthru
        _
    $region6: #{_forward_stacked.1} parent=1 // loop_footer
      %s21 = sadd.s32 1, %s17
    $region7: #{_forward_stacked.1} parent=1 // loop_footer_branch
      %16 = sbr.rel target = $region3
    $region8: #{_forward_stacked.1} parent=1 // loop_exit
      _
    %2006 = vsyncpa [#allocation3], 1
    %s2007 = scalar_lea.sflag [#allocation3], 1
    %2008 = vsyncpa %s2007, 1
    %2009 = vsyncpa [#allocation4], 1
    %s2010 = scalar_lea.sflag [#allocation4], 1
    %2011 = vsyncpa %s2010, 1

</llo_original>
